<compile_context>
chip_gen: v6e
topology: v6e:2x2x1
jax: 0.10.0
libtpu: 0.0.40
codegen_flags: <defaults>
</compile_context>

<pallas_src>
import functools

import jax
import jax.numpy as jnp
from jax.experimental import pallas as pl
from jax.experimental.pallas import tpu as pltpu


def _critic_kernel(x_ref, p_ref, b2_ref, o_ref, *, use_mxu):
    # x_ref : [S, TILE_B]   feature-major batch tile (batch along lanes)
    # p_ref : [H, S + 2]    packed params: cols [0:S] = W1^T, col S = b1, col S+1 = w2
    # b2_ref: [1, 1]        SMEM scalar
    # o_ref : [1, TILE_B]   lane-dense output row
    S = x_ref.shape[0]
    p = p_ref[...]                         # [H, S+2]; fetched once, stays VMEM-resident
    b1 = p[:, S:S + 1]                     # [H, 1]  (sliced once at tile scope)
    w2 = p[:, S + 1:S + 2]                 # [H, 1]

    if use_mxu:
        # Layer 1 on the MXU: h = W1^T @ x -> [H, TILE_B]. Frees the 4 VALU slots
        # for the ReLU / w2 multiply / sublane reduce below.
        h = jnp.dot(p[:, 0:S], x_ref[...],
                    preferred_element_type=jnp.float32) + b1
    else:
        # Exact-f32 VPU path: K = S (= 4) fully unrolled broadcast-FMAs.
        x = x_ref[...]                     # [S, TILE_B]
        h = b1 + p[:, 0:1] * x[0:1, :]
        for k in range(1, S):
            h = h + p[:, k:k + 1] * x[k:k + 1, :]

    h = jnp.maximum(h, 0.0)                # ReLU (VPU)

    # Layer 2 (N = 1): elementwise multiply (VPU) + sublane reduction (XLU) instead of
    # a 1-column MXU matmul; result is a lane-dense [1, TILE_B] row.
    y = jnp.sum(h * w2, axis=0, keepdims=True) + b2_ref[0, 0]
    o_ref[...] = y.astype(o_ref.dtype)


def _round_up(x, m):
    return (x + m - 1) // m * m


def _pick_tile_b(B):
    # Perf-review tiling policy (see module docstring).
    if B <= 2048:
        return B                                   # single tile, no padding at all
    if B <= 16384:
        return _round_up(pl.cdiv(B, 2), 256)       # exactly 2 balanced parallel tiles
    return 8192                                    # large rollouts: amortized grid steps


def critic_forward_feature_major(x_t, w1, b1, w2, b2, *, use_mxu=True, tile_b=None):
    """x_t: [state_dim, B] feature-major observations -> [B, 1] value estimates.

    Feature-major input is the kernel's native layout (batch along lanes); for batches
    that fit one tile there is no padding op in the wrapper either.
    """
    S, B = x_t.shape
    H = w1.shape[1]

    if tile_b is None:
        tile_b = _pick_tile_b(B)
    num_tiles = pl.cdiv(B, tile_b)
    B_pad = tile_b * num_tiles
    if B_pad != B:
        # Padded lanes compute a harmless finite garbage value that is sliced off below.
        x_t = jnp.pad(x_t, ((0, 0), (0, B_pad - B)))

    # Pack W1^T | b1 | w2 into a single VMEM-resident parameter slab (one DMA).
    params = jnp.concatenate(
        [w1.T, b1.reshape(H, 1), w2.reshape(H, 1)], axis=1)        # [H, S+2]
    b2_s = jnp.reshape(b2, (1, 1))

    kernel = functools.partial(_critic_kernel, use_mxu=use_mxu)

    y_row = pl.pallas_call(
        kernel,
        out_shape=jax.ShapeDtypeStruct((1, B_pad), jnp.float32),
        grid=(num_tiles,),
        in_specs=[
            pl.BlockSpec((S, tile_b), lambda i: (0, i)),            # X^T batch tile
            pl.BlockSpec((H, S + 2), lambda i: (0, 0)),             # params: VMEM-resident
            pl.BlockSpec((1, 1), lambda i: (0, 0),
                         memory_space=pltpu.MemorySpace.SMEM),      # b2 scalar
        ],
        out_specs=pl.BlockSpec((1, tile_b), lambda i: (0, i)),      # lane-dense output row
        # Tiles are <= 8192 lanes -> ~1 MiB double-buffered VMEM; no vmem_limit_bytes
        # needed even on v5e's 16 MiB scoped default.
        compiler_params=pltpu.CompilerParams(
            dimension_semantics=("parallel",)),                     # v7x: 2 TCs split tiles
    )(x_t, params, b2_s)

    return y_row[0, :B].reshape(B, 1)


def critic_forward(x, w1, b1, w2, b2, *, use_mxu=True, tile_b=None):
    """PyTorch-layout compatibility entry: x [B, state_dim] -> [B, 1]."""
    return critic_forward_feature_major(
        x.T, w1, b1, w2, b2, use_mxu=use_mxu, tile_b=tile_b)


def init_params(key, state_dim, hidden=64):
    # Mimics torch.nn.Linear default init: U[-1/sqrt(fan_in), +1/sqrt(fan_in)].
    k1, k2, k3, k4 = jax.random.split(key, 4)
    bound1 = 1.0 / jnp.sqrt(jnp.float32(state_dim))
    bound2 = 1.0 / jnp.sqrt(jnp.float32(hidden))
    w1 = jax.random.uniform(k1, (state_dim, hidden), jnp.float32, -bound1, bound1)
    b1 = jax.random.uniform(k2, (1, hidden), jnp.float32, -bound1, bound1)
    w2 = jax.random.uniform(k3, (hidden, 1), jnp.float32, -bound2, bound2)
    b2 = jax.random.uniform(k4, (1, 1), jnp.float32, -bound2, bound2)
    return w1, b1, w2, b2


if __name__ == "__main__":
    key = jax.random.PRNGKey(0)
    state_dim = 4   # CartPole-v1 observation dim
    kx_big, kx_small, kp = jax.random.split(key, 3)
    w1, b1, w2, b2 = init_params(kp, state_dim)

    def reference(x):
        h = jnp.maximum(jnp.dot(x, w1, precision="highest") + b1, 0.0)
        return jnp.dot(h, w2, precision="highest") + b2

    fwd = jax.jit(critic_forward, static_argnames=("use_mxu", "tile_b"))
    fwd_fm = jax.jit(critic_forward_feature_major, static_argnames=("use_mxu", "tile_b"))

    # Rollout-sized batch (two parallel tiles) and a tiny batch (single unpadded tile).
    x_big = jax.random.normal(kx_big, (4096, state_dim), jnp.float32)
    x_small = jax.random.normal(kx_small, (8, state_dim), jnp.float32)

    checks = []

    # Primary path: feature-major input (no wrapper transpose) + MXU layer 1.
    # Tolerance bounds worst-case bf16 rounding inside the f32 MXU passes (review note);
    # the Mosaic f32 matmul is normally multi-pass and far tighter than this.
    for x in (x_big, x_small):
        out = jax.block_until_ready(fwd_fm(x.T, w1, b1, w2, b2, use_mxu=True))
        checks.append((out, reference(x), 5e-2))

    # Exact-f32 VPU path, feature-major input: strict 1e-5 check of kernel structure.
    out = jax.block_until_ready(fwd_fm(x_big.T, w1, b1, w2, b2, use_mxu=False))
    checks.append((out, reference(x_big), 1e-5))

    # PyTorch-layout compatibility wrapper ([B, state_dim] input, transpose inside).
    out = jax.block_until_ready(fwd(x_small, w1, b1, w2, b2, use_mxu=False))
    checks.append((out, reference(x_small), 1e-5))

    for out, ref, tol in checks:
        assert out.shape == ref.shape, (out.shape, ref.shape)
        err = float(jnp.max(jnp.abs(out - ref)))
        assert jnp.allclose(out, ref, atol=tol, rtol=tol), err

    print("KERNEL_OK")
</pallas_src>

<mosaic_0001>
module attributes {stable_mosaic.version = 11 : i64} {
  func.func @_critic_kernel(%arg0: i32, %arg1: memref<4x2048xf32, #tpu.memory_space<vmem>>, %arg2: memref<64x6xf32, #tpu.memory_space<vmem>>, %arg3: memref<1x1xf32, #tpu.memory_space<smem>>, %arg4: memref<1x2048xf32, #tpu.memory_space<vmem>>) attributes {dimension_semantics = [#tpu.dimension_semantics<parallel>], iteration_bounds = array<i64: 2>, scalar_prefetch = 0 : i64, scratch_operands = 0 : i64, tpu.core_type = #tpu.core_type<tc>, window_params = [{transform_indices = @transform_0, window_bounds = array<i64: 4, 2048>}, {pipeline_mode = #tpu.pipeline_mode<synchronous>, transform_indices = @transform_1, window_bounds = array<i64: 64, 6>}, {transform_indices = @transform_2, window_bounds = array<i64: 1, 1>}, {transform_indices = @transform_3, window_bounds = array<i64: 1, 2048>}]} {
    %c0 = arith.constant 0 : index
    %c0_0 = arith.constant 0 : index
    %0 = vector.load %arg2[%c0, %c0_0] : memref<64x6xf32, #tpu.memory_space<vmem>>, vector<64x6xf32>
    %1 = vector.extract_strided_slice %0 {offsets = [0, 4], sizes = [64, 1], strides = [1, 1]} : vector<64x6xf32> to vector<64x1xf32>
    %2 = vector.extract_strided_slice %0 {offsets = [0, 5], sizes = [64, 1], strides = [1, 1]} : vector<64x6xf32> to vector<64x1xf32>
    %3 = vector.extract_strided_slice %0 {offsets = [0, 0], sizes = [64, 4], strides = [1, 1]} : vector<64x6xf32> to vector<64x4xf32>
    %c0_1 = arith.constant 0 : index
    %c0_2 = arith.constant 0 : index
    %4 = vector.load %arg1[%c0_1, %c0_2] : memref<4x2048xf32, #tpu.memory_space<vmem>>, vector<4x2048xf32>
    %cst = arith.constant dense<0.000000e+00> : vector<64x2048xf32>
    %5 = tpu.matmul %3, %4, %cst {dimension_numbers = #tpu.dot_dimension_numbers<[1], [0], [0], [1], [0, 0, 1, 1], [], []>} : vector<64x4xf32>, vector<4x2048xf32>, vector<64x2048xf32> -> vector<64x2048xf32>
    %6 = vector.broadcast %1 : vector<64x1xf32> to vector<64x2048xf32>
    %7 = arith.addf %5, %6 : vector<64x2048xf32>
    %cst_3 = arith.constant 0.000000e+00 : f32
    %8 = vector.broadcast %cst_3 : f32 to vector<64x2048xf32>
    %9 = arith.maximumf %7, %8 : vector<64x2048xf32>
    %10 = vector.broadcast %2 : vector<64x1xf32> to vector<64x2048xf32>
    %11 = arith.mulf %9, %10 : vector<64x2048xf32>
    %cst_4 = arith.constant dense<0.000000e+00> : vector<2048xf32>
    %12 = vector.multi_reduction <add>, %11, %cst_4 [0] : vector<64x2048xf32> to vector<2048xf32>
    %13 = vector.shape_cast %12 : vector<2048xf32> to vector<1x2048xf32>
    %c0_5 = arith.constant 0 : index
    %c0_6 = arith.constant 0 : index
    %14 = memref.load %arg3[%c0_5, %c0_6] : memref<1x1xf32, #tpu.memory_space<smem>>
    %15 = vector.broadcast %14 : f32 to vector<1x2048xf32>
    %16 = arith.addf %13, %15 : vector<1x2048xf32>
    %c0_7 = arith.constant 0 : index
    %c0_8 = arith.constant 0 : index
    %17 = vector.load %arg4[%c0_7, %c0_8] : memref<1x2048xf32, #tpu.memory_space<vmem>>, vector<1x2048xf32>
    tpu.vector_store %arg4[%c0_7, %c0_8], %16 {strides = array<i32>} : memref<1x2048xf32, #tpu.memory_space<vmem>>, vector<1x2048xf32>,
    return
  }
  func.func @transform_0(%arg0: i32) -> (i32, i32) {
    %c0_i32 = arith.constant 0 : i32
    %c0_i32_0 = arith.constant 0 : i32
    return %c0_i32, %arg0 : i32, i32
  }
  func.func @transform_1(%arg0: i32) -> (i32, i32) {
    %c0_i32 = arith.constant 0 : i32
    %c0_i32_0 = arith.constant 0 : i32
    %c0_i32_1 = arith.constant 0 : i32
    return %c0_i32, %c0_i32_0 : i32, i32
  }
  func.func @transform_2(%arg0: i32) -> (i32, i32) {
    %c0_i32 = arith.constant 0 : i32
    %c0_i32_0 = arith.constant 0 : i32
    %c0_i32_1 = arith.constant 0 : i32
    return %c0_i32, %c0_i32_0 : i32, i32
  }
  func.func @transform_3(%arg0: i32) -> (i32, i32) {
    %c0_i32 = arith.constant 0 : i32
    %c0_i32_0 = arith.constant 0 : i32
    return %c0_i32, %arg0 : i32, i32
  }
}

</mosaic_0001>

<llo_original>
// kernel: critic_forward_feature_major.1
$region0: #{critic_forward_feature_major.1}
  #allocation0 [shape = 'u32[]', space=smem, size = 0x4, offset = 0x4, fixed_abs, tag = 'smem constant byte address 0x4 - core index']
  #allocation1 [shape = 'u32[144,128]{1,0:T(1,128)}', space=vmem, size = 0x12000, scoped, tag = 'internal scratch']
  #allocation2 [shape = 'f32[1,1]{1,0:T(1,128)S(6)}', space=smem, size = 0x200, scoped, tag = 'scoped memory for critic_forward_feature_major.1']
  %s0 = inlined_call_operand.hbm [shape: f32[4,4096], index: 0, kind: input, shape index: {}]
  %s1 = inlined_call_operand.vmem [shape: f32[64,6], index: 1, kind: input, shape index: {}]
  %s2 = inlined_call_operand.<no memory space> [shape: f32[1,1], index: 2, kind: input, shape index: {}]
  %s3 = inlined_call_operand.hbm [shape: f32[1,4096], index: 3, kind: output, shape index: {}]
  %s4 = sld [smem:[#allocation0]]
  $region49: #{critic_forward_feature_major.1} parent=0
    _
  %s6 = ssub.s32 1, %s4
  %s7 = scalar_select 0, %s6, %s4
  %8 = sst [smem:[#allocation2]] %s2
  $region1: #{critic_forward_feature_major.1} parent=0
    #allocation3 [shape = 'u8[65536]{0}', space=vmem, size = 0x10000, scoped, tag = 'input window, operand 0']
    #allocation4 [shape = 's32[2]{0}', space=sflag, size = 0x8, scoped, tag = 'scoped memory for critic_forward_feature_major.1']
    #allocation5 [shape = 's32[2]{0}', space=sflag, size = 0x8, scoped, tag = 'scoped memory for critic_forward_feature_major.1']
    #allocation6 [shape = 'u8[16384]{0}', space=vmem, size = 0x4000, scoped, tag = 'output window, operand 0']
    %9 = vsyncpa [#allocation4], 0
    %s10 = scalar_lea.sflag [#allocation4], 1
    %11 = vsyncpa %s10, 0
    %12 = vsyncpa [#allocation5], 0
    %s13 = scalar_lea.sflag [#allocation5], 1
    %14 = vsyncpa %s13, 0
    loop: start=0, step=1, limit=4
    $region2: #{critic_forward_feature_major.1} parent=1 // loop_pre_header
      _
    $region3: #{critic_forward_feature_major.1} parent=1 // loop_header
      %s16 = sphi 0, %s20
      %p17 = scmp.ge.s32.totalorder %s16, 4
      %s26 = sphi 0, %s28
      %s29 = sphi 0, %s26
      %s30 = sphi 0, %s29
      %s46 = sphi 0, %s30
      %s50 = sphi 0, %s50
      %s52 = sphi 0, %s50
      %s53 = sphi 0, %s52
      %s67 = sphi 0, %s53
      %s71 = sphi 0, %s71
      %s73 = sphi 0, %s71
      %s74 = sphi 0, %s73
      %s88 = sphi 0, %s74
      %s94 = sphi 0, %s96
      %s97 = sphi 0, %s94
      %s98 = sphi 0, %s97
      %s114 = sphi 0, %s98
    $region4: #{critic_forward_feature_major.1} parent=1 // loop_header_branch
      %19 = sbr.rel (%p17) target = $region8
    $region5: #{critic_forward_feature_major.1} parent=1 // loop_body
      %s21 = ssub.s32 %s16, 1
      %s22 = ssub.s32 %s16, 2
      %s23 = sadd.s32 %s16, 1
      %s24 = ssub.s32 %s16, %s23
      %p25 = scmp.eq.s32.totalorder %s24, 0
      %s27 = sadd.s32 %s26, 1
      %s28 = scalar_select %p25, %s26, %s27
      %p31 = pneg %p25
      %p32 = scmp.eq.s32.totalorder %s16, 1
      %p33 = por %p31, %p32
      %p34 = scmp.ne.s32.totalorder %s26, %s29
      %p35 = scmp.eq.s32.totalorder %s16, 0
      %p36 = por %p34, %p35
      %p37 = scmp.ne.s32.totalorder %s26, %s29
      %p38 = scmp.eq.s32.totalorder %s21, 1
      %p39 = por %p37, %p38
      %p40 = scmp.ne.s32.totalorder %s29, %s30
      %p41 = scmp.eq.s32.totalorder %s21, 0
      %p42 = por %p40, %p41
      %p43 = scmp.ne.s32.totalorder %s29, %s30
      %p44 = scmp.eq.s32.totalorder %s22, 1
      %p45 = por %p43, %p44
      %p47 = scmp.ne.s32.totalorder %s30, %s46
      %p48 = scmp.eq.s32.totalorder %s22, 0
      %p49 = por %p47, %p48
      %s51 = sadd.s32 %s50, 1
      %p54 = scmp.eq.s32.totalorder %s16, 1
      %p55 = scmp.ne.s32.totalorder %s50, %s52
      %p56 = scmp.eq.s32.totalorder %s16, 0
      %p57 = por %p55, %p56
      %p58 = scmp.ne.s32.totalorder %s50, %s52
      %p59 = scmp.eq.s32.totalorder %s21, 1
      %p60 = por %p58, %p59
      %p61 = scmp.ne.s32.totalorder %s52, %s53
      %p62 = scmp.eq.s32.totalorder %s21, 0
      %p63 = por %p61, %p62
      %p64 = scmp.ne.s32.totalorder %s52, %s53
      %p65 = scmp.eq.s32.totalorder %s22, 1
      %p66 = por %p64, %p65
      %p68 = scmp.ne.s32.totalorder %s53, %s67
      %p69 = scmp.eq.s32.totalorder %s22, 0
      %p70 = por %p68, %p69
      %s72 = sadd.s32 %s71, 1
      %p75 = scmp.eq.s32.totalorder %s16, 1
      %p76 = scmp.ne.s32.totalorder %s71, %s73
      %p77 = scmp.eq.s32.totalorder %s16, 0
      %p78 = por %p76, %p77
      %p79 = scmp.ne.s32.totalorder %s71, %s73
      %p80 = scmp.eq.s32.totalorder %s21, 1
      %p81 = por %p79, %p80
      %p82 = scmp.ne.s32.totalorder %s73, %s74
      %p83 = scmp.eq.s32.totalorder %s21, 0
      %p84 = por %p82, %p83
      %p85 = scmp.ne.s32.totalorder %s73, %s74
      %p86 = scmp.eq.s32.totalorder %s22, 1
      %p87 = por %p85, %p86
      %p89 = scmp.ne.s32.totalorder %s74, %s88
      %p90 = scmp.eq.s32.totalorder %s22, 0
      %p91 = por %p89, %p90
      %s92 = ssub.s32 %s16, %s23
      %p93 = scmp.eq.s32.totalorder %s92, 0
      %s95 = sadd.s32 %s94, 1
      %s96 = scalar_select %p93, %s94, %s95
      %p99 = pneg %p93
      %p100 = scmp.eq.s32.totalorder %s16, 1
      %p101 = por %p99, %p100
      %p102 = scmp.ne.s32.totalorder %s94, %s97
      %p103 = scmp.eq.s32.totalorder %s16, 0
      %p104 = por %p102, %p103
      %p105 = scmp.ne.s32.totalorder %s94, %s97
      %p106 = scmp.eq.s32.totalorder %s21, 1
      %p107 = por %p105, %p106
      %p108 = scmp.ne.s32.totalorder %s97, %s98
      %p109 = scmp.eq.s32.totalorder %s21, 0
      %p110 = por %p108, %p109
      %p111 = scmp.ne.s32.totalorder %s97, %s98
      %p112 = scmp.eq.s32.totalorder %s22, 1
      %p113 = por %p111, %p112
      %p115 = scmp.ne.s32.totalorder %s98, %s114
      %p116 = scmp.eq.s32.totalorder %s22, 0
      %p117 = por %p115, %p116
      %p118 = scmp.le.s32.totalorder 1, %s16
      %p119 = scmp.lt.s32.totalorder %s16, 3
      %p120 = pnand %p118, %p119
      %p121 = pneg %p120
      // Predicated region
      $region9: #{critic_forward_feature_major.1} parent=5 // pred_check
        _
      $region10: #{critic_forward_feature_major.1} parent=5 // pred_check_branch
        %123 = sbr.rel (%p120) target = $region12
      $region11: #{critic_forward_feature_major.1} parent=5 // pred_region
        %s124 = ssub.s32 %s16, 1
        // Predicated region
        $region13: #{critic_forward_feature_major.1} parent=11 // pred_check
          %p125 = pneg %p63
        $region14: #{critic_forward_feature_major.1} parent=11 // pred_check_branch
          %127 = sbr.rel (%p125) target = $region16
        $region15: #{critic_forward_feature_major.1} parent=11 // pred_region
          _
        $region16: #{critic_forward_feature_major.1} parent=11 // pred_fallthru
          _
        // Predicated region
        $region17: #{critic_forward_feature_major.1} parent=11 // pred_check
          %p128 = pneg %p84
        $region18: #{critic_forward_feature_major.1} parent=11 // pred_check_branch
          %130 = sbr.rel (%p128) target = $region20
        $region19: #{critic_forward_feature_major.1} parent=11 // pred_region
          _
        $region20: #{critic_forward_feature_major.1} parent=11 // pred_fallthru
          _
      $region12: #{critic_forward_feature_major.1} parent=5 // pred_fallthru
        _
      %p131 = scmp.lt.s32.totalorder %s16, 2
      // Predicated region
      $region21: #{critic_forward_feature_major.1} parent=5 // pred_check
        %p132 = pneg %p131
      $region22: #{critic_forward_feature_major.1} parent=5 // pred_check_branch
        %134 = sbr.rel (%p132) target = $region24
      $region23: #{critic_forward_feature_major.1} parent=5 // pred_region
        // Predicated region
        $region25: #{critic_forward_feature_major.1} parent=23 // pred_check
          %p135 = pneg %p36
        $region26: #{critic_forward_feature_major.1} parent=23 // pred_check_branch
          %137 = sbr.rel (%p135) target = $region28
        $region27: #{critic_forward_feature_major.1} parent=23 // pred_region
          %s138 = sand.u32 %s26, 1
          %s139 = scalar_lea.sflag [#allocation4], %s138
          %s140 = sand.u32 %s26, 1
          %s141 = smul.addr %s140, 64
          %s142 = scalar_lea.vmem [#allocation3], %s141
          %s143 = smul.u32 16, %s16
          %s145 = ssub.s32 1024, 1024
          %146 = vsyncadd %s139, %s145
          %s147 = smul.addr %s143, 64
          %s148 = scalar_lea.hbm %s0, %s147
          %s150 = sshll.u32 %s142, 4
          %s151 = int_to_ptr.vmem [resolvable:$true] %s150
          %153 = dma.hbm_to_vmem [thread:$0]  %s148, 1024, %s151, %s139
        $region28: #{critic_forward_feature_major.1} parent=23 // pred_fallthru
          _
      $region24: #{critic_forward_feature_major.1} parent=5 // pred_fallthru
        _
      %p154 = scmp.le.s32.totalorder 1, %s16
      %p155 = scmp.lt.s32.totalorder %s16, 3
      %p156 = pnand %p154, %p155
      %p157 = pneg %p156
      // Predicated region
      $region29: #{critic_forward_feature_major.1} parent=5 // pred_check
        _
      $region30: #{critic_forward_feature_major.1} parent=5 // pred_check_branch
        %159 = sbr.rel (%p156) target = $region32
      $region31: #{critic_forward_feature_major.1} parent=5 // pred_region
        %s160 = ssub.s32 %s16, 1
        %s161 = sand.u32 %s29, 1
        %s162 = scalar_lea.sflag [#allocation4], %s161
        %s163 = sand.u32 %s29, 1
        %s164 = smul.addr %s163, 64
        %s165 = scalar_lea.vmem [#allocation3], %s164
        // Predicated region
        $region33: #{critic_forward_feature_major.1} parent=31 // pred_check
          %p166 = pneg %p42
        $region34: #{critic_forward_feature_major.1} parent=31 // pred_check_branch
          %168 = sbr.rel (%p166) target = $region36
        $region35: #{critic_forward_feature_major.1} parent=31 // pred_region
          %169 = dma.done %s162, 1024
        $region36: #{critic_forward_feature_major.1} parent=31 // pred_fallthru
          _
        %s170 = sand.u32 %s29, 1
        %s171 = scalar_lea.sflag [#allocation4], %s170
        %s172 = sand.u32 %s29, 1
        %s173 = smul.addr %s172, 64
        %s174 = scalar_lea.vmem [#allocation3], %s173
        %p175 = pneg %p42
        %p176 = pneg %p39
        %p177 = pneg %p63
        %p178 = pneg %p60
        %p179 = pneg %p84
        %p180 = pneg %p81
        %p181 = pneg %p110
        %p182 = pneg %p107
        %s183 = sand.u32 %s97, 1
        %s184 = scalar_lea.sflag [#allocation5], %s183
        %s185 = sand.u32 %s97, 1
        %s186 = smul.addr %s185, 16
        %s187 = scalar_lea.vmem [#allocation6], %s186
        %s188 = smul.u32 16, %s21
        %s189 = smul.u32 16, %s21
        %v190 = vld [vmem:[%s1] sm:$0xff]
        %v191 = vld [vmem:[%s1 + $0x8] sm:$0xff]
        %v192 = vld [vmem:[%s1 + $0x10] sm:$0xff]
        %v193 = vld [vmem:[%s1 + $0x18] sm:$0xff]
        %v194 = vld [vmem:[%s1 + $0x20] sm:$0xff]
        %v195 = vld [vmem:[%s1 + $0x28] sm:$0xff]
        %v196 = vld [vmem:[%s1 + $0x30] sm:$0xff]
        %v197 = vld [vmem:[%s1 + $0x38] sm:$0xff]
        %v198 = vld [vmem:[%s165] sm:$0xff]
        %v199 = vld [vmem:[%s165 + $0x8] sm:$0xff]
        %v200 = vld [vmem:[%s165 + $0x10] sm:$0xff]
        %v201 = vld [vmem:[%s165 + $0x18] sm:$0xff]
        %v202 = vld [vmem:[%s165 + $0x20] sm:$0xff]
        %v203 = vld [vmem:[%s165 + $0x28] sm:$0xff]
        %v204 = vld [vmem:[%s165 + $0x30] sm:$0xff]
        %v205 = vld [vmem:[%s165 + $0x38] sm:$0xff]
        %207 = vset.pattern.permute.xlu0 4
        %208 = vperm.xlu0 %207, %v190
        %v209 = vpop.permute.xlu0 %208
        %212 = vset.pattern.permute.xlu0 4
        %213 = vperm.xlu0 %212, %v191
        %v214 = vpop.permute.xlu0 %213
        %217 = vset.pattern.permute.xlu0 4
        %218 = vperm.xlu0 %217, %v192
        %v219 = vpop.permute.xlu0 %218
        %222 = vset.pattern.permute.xlu0 4
        %223 = vperm.xlu0 %222, %v193
        %v224 = vpop.permute.xlu0 %223
        %227 = vset.pattern.permute.xlu0 4
        %228 = vperm.xlu0 %227, %v194
        %v229 = vpop.permute.xlu0 %228
        %232 = vset.pattern.permute.xlu0 4
        %233 = vperm.xlu0 %232, %v195
        %v234 = vpop.permute.xlu0 %233
        %237 = vset.pattern.permute.xlu0 4
        %238 = vperm.xlu0 %237, %v196
        %v239 = vpop.permute.xlu0 %238
        %242 = vset.pattern.permute.xlu0 4
        %243 = vperm.xlu0 %242, %v197
        %v244 = vpop.permute.xlu0 %243
        %v254 = vcombine.high %v198, %v198
        %v255 = vcombine.high %v199, %v199
        %v256 = vcombine.high %v200, %v200
        %v257 = vcombine.high %v201, %v201
        %v258 = vcombine.high %v202, %v202
        %v259 = vcombine.high %v203, %v203
        %v260 = vcombine.high %v204, %v204
        %v261 = vcombine.high %v205, %v205
        %vm262 = vcmask 31744
        %v263 = vsel %vm262, %v190, 0
        %v265 = vsel %vm262, %v191, 0
        %v267 = vsel %vm262, %v192, 0
        %v269 = vsel %vm262, %v193, 0
        %v271 = vsel %vm262, %v194, 0
        %v273 = vsel %vm262, %v195, 0
        %v275 = vsel %vm262, %v196, 0
        %v277 = vsel %vm262, %v197, 0
        %vm279 = vcmask 1043456
        %v280 = vsel %vm279, %v198, 0
        %v282 = vsel %vm279, %v254, 0
        %v284 = vsel %vm279, %v199, 0
        %v286 = vsel %vm279, %v255, 0
        %v288 = vsel %vm279, %v200, 0
        %v290 = vsel %vm279, %v256, 0
        %v292 = vsel %vm279, %v201, 0
        %v294 = vsel %vm279, %v257, 0
        %v296 = vsel %vm279, %v202, 0
        %v298 = vsel %vm279, %v258, 0
        %v300 = vsel %vm279, %v203, 0
        %v302 = vsel %vm279, %v259, 0
        %v304 = vsel %vm279, %v204, 0
        %v306 = vsel %vm279, %v260, 0
        %v308 = vsel %vm279, %v205, 0
        %v310 = vsel %vm279, %v261, 0
        %312 = vmatprep.subr.mxu0 0.0
        %313 = vmatpush1.msra.mxu0 0.0
        %314 = vmatprep.subr.mxu0 0.0
        %315 = vmatpush1.msra.mxu0 0.0
        %316 = vmatprep.subr.mxu0 0.0
        %317 = vmatpush1.msra.mxu0 0.0
        %318 = vmatprep.subr.mxu0 0.0
        %319 = vmatpush1.msra.mxu0 0.0
        %320 = vmatprep.subr.mxu0 0.0
        %321 = vmatpush1.msra.mxu0 0.0
        %322 = vmatprep.subr.mxu0 0.0
        %323 = vmatpush1.msra.mxu0 0.0
        %324 = vmatprep.subr.mxu0 0.0
        %325 = vmatpush1.msra.mxu0 0.0
        %326 = vmatprep.subr.mxu0 0.0
        %327 = vmatpush1.msra.mxu0 0.0
        %328 = vmatprep.subr.mxu0 0.0
        %329 = vmatpush1.msra.mxu0 0.0
        %330 = vmatprep.subr.mxu0 0.0
        %331 = vmatpush1.msra.mxu0 0.0
        %332 = vmatprep.subr.mxu0 0.0
        %333 = vmatpush1.msra.mxu0 0.0
        %334 = vmatprep.subr.mxu0 0.0
        %335 = vmatpush1.msra.mxu0 0.0
        %336 = vmatprep.subr.mxu0 0.0
        %337 = vmatpush1.msra.mxu0 0.0
        %338 = vmatprep.subr.mxu0 0.0
        %339 = vmatpush1.msra.mxu0 0.0
        %340 = vmatprep.subr.mxu0 0.0
        %341 = vmatpush1.msra.mxu0 0.0
        %342 = vmatprep.subr.mxu0 %v282
        %343 = vmatpush1.msra.mxu0 %v280
        %344 = vmatprep.subr.mxu0 0.0
        %345 = vmatpush2.msra.mxu0 0.0
        %346 = vmatprep.subr.mxu0 0.0
        %347 = vmatpush2.msra.mxu0 0.0
        %348 = vmatprep.subr.mxu0 0.0
        %349 = vmatpush2.msra.mxu0 0.0
        %350 = vmatprep.subr.mxu0 0.0
        %351 = vmatpush2.msra.mxu0 0.0
        %352 = vmatprep.subr.mxu0 0.0
        %353 = vmatpush2.msra.mxu0 0.0
        %354 = vmatprep.subr.mxu0 0.0
        %355 = vmatpush2.msra.mxu0 0.0
        %356 = vmatprep.subr.mxu0 0.0
        %357 = vmatpush2.msra.mxu0 0.0
        %358 = vmatprep.subr.mxu0 0.0
        %359 = vmatpush2.msra.mxu0 0.0
        %360 = vmatprep.subr.mxu0 0.0
        %361 = vmatpush2.msra.mxu0 0.0
        %362 = vmatprep.subr.mxu0 0.0
        %363 = vmatpush2.msra.mxu0 0.0
        %364 = vmatprep.subr.mxu0 0.0
        %365 = vmatpush2.msra.mxu0 0.0
        %366 = vmatprep.subr.mxu0 0.0
        %367 = vmatpush2.msra.mxu0 0.0
        %368 = vmatprep.subr.mxu0 0.0
        %369 = vmatpush2.msra.mxu0 0.0
        %370 = vmatprep.subr.mxu0 0.0
        %371 = vmatpush2.msra.mxu0 0.0
        %372 = vmatprep.subr.mxu0 0.0
        %373 = vmatpush2.msra.mxu0 0.0
        %374 = vmatprep.subr.mxu0 0.0
        %375 = vmatpush2.msra.mxu0 0.0
        %376 = vmatprep.mubr.f32.mxu0 0.0
        %377 = vmatmul.mubr.f32.gmra.mxu0 %v263
        %v378 = vpop.f32.mrf.mxu0
        %v379 = vadd.f32 %v209, %v378
        %v380 = vpop.f32.mrf.mxu0
        %v381 = vadd.f32 %v209, %v380
        %382 = vmatprep.mubr.f32.mxu0 0.0
        %383 = vmatmul.mubr.f32.gmra.mxu0 %v265
        %v384 = vpop.f32.mrf.mxu0
        %v385 = vadd.f32 %v214, %v384
        %v386 = vpop.f32.mrf.mxu0
        %v387 = vadd.f32 %v214, %v386
        %388 = vmatprep.mubr.f32.mxu0 0.0
        %389 = vmatmul.mubr.f32.gmra.mxu0 %v267
        %v390 = vpop.f32.mrf.mxu0
        %v391 = vadd.f32 %v219, %v390
        %v392 = vpop.f32.mrf.mxu0
        %v393 = vadd.f32 %v219, %v392
        %394 = vmatprep.mubr.f32.mxu0 0.0
        %395 = vmatmul.mubr.f32.gmra.mxu0 %v269
        %v396 = vpop.f32.mrf.mxu0
        %v397 = vadd.f32 %v224, %v396
        %v398 = vpop.f32.mrf.mxu0
        %v399 = vadd.f32 %v224, %v398
        %400 = vmatprep.mubr.f32.mxu0 0.0
        %401 = vmatmul.mubr.f32.gmra.mxu0 %v271
        %v402 = vpop.f32.mrf.mxu0
        %v403 = vadd.f32 %v229, %v402
        %v404 = vpop.f32.mrf.mxu0
        %v405 = vadd.f32 %v229, %v404
        %406 = vmatprep.mubr.f32.mxu0 0.0
        %407 = vmatmul.mubr.f32.gmra.mxu0 %v273
        %v408 = vpop.f32.mrf.mxu0
        %v409 = vadd.f32 %v234, %v408
        %v410 = vpop.f32.mrf.mxu0
        %v411 = vadd.f32 %v234, %v410
        %412 = vmatprep.mubr.f32.mxu0 0.0
        %413 = vmatmul.mubr.f32.gmra.mxu0 %v275
        %v414 = vpop.f32.mrf.mxu0
        %v415 = vadd.f32 %v239, %v414
        %v416 = vpop.f32.mrf.mxu0
        %v417 = vadd.f32 %v239, %v416
        %418 = vmatprep.mubr.f32.mxu0 0.0
        %419 = vmatmul.mubr.f32.gmra.mxu0 %v277
        %v420 = vpop.f32.mrf.mxu0
        %v421 = vadd.f32 %v244, %v420
        %v422 = vpop.f32.mrf.mxu0
        %v423 = vadd.f32 %v244, %v422
        %424 = vdwg.mxu0
        %425 = vmatprep.subr.mxu0 0.0
        %426 = vmatpush1.msra.mxu0 0.0
        %427 = vmatprep.subr.mxu0 0.0
        %428 = vmatpush1.msra.mxu0 0.0
        %429 = vmatprep.subr.mxu0 0.0
        %430 = vmatpush1.msra.mxu0 0.0
        %431 = vmatprep.subr.mxu0 0.0
        %432 = vmatpush1.msra.mxu0 0.0
        %433 = vmatprep.subr.mxu0 0.0
        %434 = vmatpush1.msra.mxu0 0.0
        %435 = vmatprep.subr.mxu0 0.0
        %436 = vmatpush1.msra.mxu0 0.0
        %437 = vmatprep.subr.mxu0 0.0
        %438 = vmatpush1.msra.mxu0 0.0
        %439 = vmatprep.subr.mxu0 0.0
        %440 = vmatpush1.msra.mxu0 0.0
        %441 = vmatprep.subr.mxu0 0.0
        %442 = vmatpush1.msra.mxu0 0.0
        %443 = vmatprep.subr.mxu0 0.0
        %444 = vmatpush1.msra.mxu0 0.0
        %445 = vmatprep.subr.mxu0 0.0
        %446 = vmatpush1.msra.mxu0 0.0
        %447 = vmatprep.subr.mxu0 0.0
        %448 = vmatpush1.msra.mxu0 0.0
        %449 = vmatprep.subr.mxu0 0.0
        %450 = vmatpush1.msra.mxu0 0.0
        %451 = vmatprep.subr.mxu0 0.0
        %452 = vmatpush1.msra.mxu0 0.0
        %453 = vmatprep.subr.mxu0 0.0
        %454 = vmatpush1.msra.mxu0 0.0
        %455 = vmatprep.subr.mxu0 %v286
        %456 = vmatpush1.msra.mxu0 %v284
        %457 = vmatprep.subr.mxu0 0.0
        %458 = vmatpush2.msra.mxu0 0.0
        %459 = vmatprep.subr.mxu0 0.0
        %460 = vmatpush2.msra.mxu0 0.0
        %461 = vmatprep.subr.mxu0 0.0
        %462 = vmatpush2.msra.mxu0 0.0
        %463 = vmatprep.subr.mxu0 0.0
        %464 = vmatpush2.msra.mxu0 0.0
        %465 = vmatprep.subr.mxu0 0.0
        %466 = vmatpush2.msra.mxu0 0.0
        %467 = vmatprep.subr.mxu0 0.0
        %468 = vmatpush2.msra.mxu0 0.0
        %469 = vmatprep.subr.mxu0 0.0
        %470 = vmatpush2.msra.mxu0 0.0
        %471 = vmatprep.subr.mxu0 0.0
        %472 = vmatpush2.msra.mxu0 0.0
        %473 = vmatprep.subr.mxu0 0.0
        %474 = vmatpush2.msra.mxu0 0.0
        %475 = vmatprep.subr.mxu0 0.0
        %476 = vmatpush2.msra.mxu0 0.0
        %477 = vmatprep.subr.mxu0 0.0
        %478 = vmatpush2.msra.mxu0 0.0
        %479 = vmatprep.subr.mxu0 0.0
        %480 = vmatpush2.msra.mxu0 0.0
        %481 = vmatprep.subr.mxu0 0.0
        %482 = vmatpush2.msra.mxu0 0.0
        %483 = vmatprep.subr.mxu0 0.0
        %484 = vmatpush2.msra.mxu0 0.0
        %485 = vmatprep.subr.mxu0 0.0
        %486 = vmatpush2.msra.mxu0 0.0
        %487 = vmatprep.subr.mxu0 0.0
        %488 = vmatpush2.msra.mxu0 0.0
        %489 = vmatprep.mubr.f32.mxu0 0.0
        %490 = vmatmul.mubr.f32.gmra.mxu0 %v263
        %v491 = vpop.f32.mrf.mxu0
        %v492 = vadd.f32 %v209, %v491
        %v493 = vpop.f32.mrf.mxu0
        %v494 = vadd.f32 %v209, %v493
        %495 = vmatprep.mubr.f32.mxu0 0.0
        %496 = vmatmul.mubr.f32.gmra.mxu0 %v265
        %v497 = vpop.f32.mrf.mxu0
        %v498 = vadd.f32 %v214, %v497
        %v499 = vpop.f32.mrf.mxu0
        %v500 = vadd.f32 %v214, %v499
        %501 = vmatprep.mubr.f32.mxu0 0.0
        %502 = vmatmul.mubr.f32.gmra.mxu0 %v267
        %v503 = vpop.f32.mrf.mxu0
        %v504 = vadd.f32 %v219, %v503
        %v505 = vpop.f32.mrf.mxu0
        %v506 = vadd.f32 %v219, %v505
        %507 = vmatprep.mubr.f32.mxu0 0.0
        %508 = vmatmul.mubr.f32.gmra.mxu0 %v269
        %v509 = vpop.f32.mrf.mxu0
        %v510 = vadd.f32 %v224, %v509
        %v511 = vpop.f32.mrf.mxu0
        %v512 = vadd.f32 %v224, %v511
        %513 = vmatprep.mubr.f32.mxu0 0.0
        %514 = vmatmul.mubr.f32.gmra.mxu0 %v271
        %v515 = vpop.f32.mrf.mxu0
        %v516 = vadd.f32 %v229, %v515
        %v517 = vpop.f32.mrf.mxu0
        %v518 = vadd.f32 %v229, %v517
        %519 = vmatprep.mubr.f32.mxu0 0.0
        %520 = vmatmul.mubr.f32.gmra.mxu0 %v273
        %v521 = vpop.f32.mrf.mxu0
        %v522 = vadd.f32 %v234, %v521
        %v523 = vpop.f32.mrf.mxu0
        %v524 = vadd.f32 %v234, %v523
        %525 = vmatprep.mubr.f32.mxu0 0.0
        %526 = vmatmul.mubr.f32.gmra.mxu0 %v275
        %v527 = vpop.f32.mrf.mxu0
        %v528 = vadd.f32 %v239, %v527
        %v529 = vpop.f32.mrf.mxu0
        %v530 = vadd.f32 %v239, %v529
        %531 = vmatprep.mubr.f32.mxu0 0.0
        %532 = vmatmul.mubr.f32.gmra.mxu0 %v277
        %v533 = vpop.f32.mrf.mxu0
        %v534 = vadd.f32 %v244, %v533
        %v535 = vpop.f32.mrf.mxu0
        %v536 = vadd.f32 %v244, %v535
        %537 = vdwg.mxu0
        %538 = vmatprep.subr.mxu0 0.0
        %539 = vmatpush1.msra.mxu0 0.0
        %540 = vmatprep.subr.mxu0 0.0
        %541 = vmatpush1.msra.mxu0 0.0
        %542 = vmatprep.subr.mxu0 0.0
        %543 = vmatpush1.msra.mxu0 0.0
        %544 = vmatprep.subr.mxu0 0.0
        %545 = vmatpush1.msra.mxu0 0.0
        %546 = vmatprep.subr.mxu0 0.0
        %547 = vmatpush1.msra.mxu0 0.0
        %548 = vmatprep.subr.mxu0 0.0
        %549 = vmatpush1.msra.mxu0 0.0
        %550 = vmatprep.subr.mxu0 0.0
        %551 = vmatpush1.msra.mxu0 0.0
        %552 = vmatprep.subr.mxu0 0.0
        %553 = vmatpush1.msra.mxu0 0.0
        %554 = vmatprep.subr.mxu0 0.0
        %555 = vmatpush1.msra.mxu0 0.0
        %556 = vmatprep.subr.mxu0 0.0
        %557 = vmatpush1.msra.mxu0 0.0
        %558 = vmatprep.subr.mxu0 0.0
        %559 = vmatpush1.msra.mxu0 0.0
        %560 = vmatprep.subr.mxu0 0.0
        %561 = vmatpush1.msra.mxu0 0.0
        %562 = vmatprep.subr.mxu0 0.0
        %563 = vmatpush1.msra.mxu0 0.0
        %564 = vmatprep.subr.mxu0 0.0
        %565 = vmatpush1.msra.mxu0 0.0
        %566 = vmatprep.subr.mxu0 0.0
        %567 = vmatpush1.msra.mxu0 0.0
        %568 = vmatprep.subr.mxu0 %v290
        %569 = vmatpush1.msra.mxu0 %v288
        %570 = vmatprep.subr.mxu0 0.0
        %571 = vmatpush2.msra.mxu0 0.0
        %572 = vmatprep.subr.mxu0 0.0
        %573 = vmatpush2.msra.mxu0 0.0
        %574 = vmatprep.subr.mxu0 0.0
        %575 = vmatpush2.msra.mxu0 0.0
        %576 = vmatprep.subr.mxu0 0.0
        %577 = vmatpush2.msra.mxu0 0.0
        %578 = vmatprep.subr.mxu0 0.0
        %579 = vmatpush2.msra.mxu0 0.0
        %580 = vmatprep.subr.mxu0 0.0
        %581 = vmatpush2.msra.mxu0 0.0
        %582 = vmatprep.subr.mxu0 0.0
        %583 = vmatpush2.msra.mxu0 0.0
        %584 = vmatprep.subr.mxu0 0.0
        %585 = vmatpush2.msra.mxu0 0.0
        %586 = vmatprep.subr.mxu0 0.0
        %587 = vmatpush2.msra.mxu0 0.0
        %588 = vmatprep.subr.mxu0 0.0
        %589 = vmatpush2.msra.mxu0 0.0
        %590 = vmatprep.subr.mxu0 0.0
        %591 = vmatpush2.msra.mxu0 0.0
        %592 = vmatprep.subr.mxu0 0.0
        %593 = vmatpush2.msra.mxu0 0.0
        %594 = vmatprep.subr.mxu0 0.0
        %595 = vmatpush2.msra.mxu0 0.0
        %596 = vmatprep.subr.mxu0 0.0
        %597 = vmatpush2.msra.mxu0 0.0
        %598 = vmatprep.subr.mxu0 0.0
        %599 = vmatpush2.msra.mxu0 0.0
        %600 = vmatprep.subr.mxu0 0.0
        %601 = vmatpush2.msra.mxu0 0.0
        %602 = vmatprep.mubr.f32.mxu0 0.0
        %603 = vmatmul.mubr.f32.gmra.mxu0 %v263
        %v604 = vpop.f32.mrf.mxu0
        %v605 = vadd.f32 %v209, %v604
        %v606 = vpop.f32.mrf.mxu0
        %v607 = vadd.f32 %v209, %v606
        %608 = vmatprep.mubr.f32.mxu0 0.0
        %609 = vmatmul.mubr.f32.gmra.mxu0 %v265
        %v610 = vpop.f32.mrf.mxu0
        %v611 = vadd.f32 %v214, %v610
        %v612 = vpop.f32.mrf.mxu0
        %v613 = vadd.f32 %v214, %v612
        %614 = vmatprep.mubr.f32.mxu0 0.0
        %615 = vmatmul.mubr.f32.gmra.mxu0 %v267
        %v616 = vpop.f32.mrf.mxu0
        %v617 = vadd.f32 %v219, %v616
        %v618 = vpop.f32.mrf.mxu0
        %v619 = vadd.f32 %v219, %v618
        %620 = vmatprep.mubr.f32.mxu0 0.0
        %621 = vmatmul.mubr.f32.gmra.mxu0 %v269
        %v622 = vpop.f32.mrf.mxu0
        %v623 = vadd.f32 %v224, %v622
        %v624 = vpop.f32.mrf.mxu0
        %v625 = vadd.f32 %v224, %v624
        %626 = vmatprep.mubr.f32.mxu0 0.0
        %627 = vmatmul.mubr.f32.gmra.mxu0 %v271
        %v628 = vpop.f32.mrf.mxu0
        %v629 = vadd.f32 %v229, %v628
        %v630 = vpop.f32.mrf.mxu0
        %v631 = vadd.f32 %v229, %v630
        %632 = vmatprep.mubr.f32.mxu0 0.0
        %633 = vmatmul.mubr.f32.gmra.mxu0 %v273
        %v634 = vpop.f32.mrf.mxu0
        %v635 = vadd.f32 %v234, %v634
        %v636 = vpop.f32.mrf.mxu0
        %v637 = vadd.f32 %v234, %v636
        %638 = vmatprep.mubr.f32.mxu0 0.0
        %639 = vmatmul.mubr.f32.gmra.mxu0 %v275
        %v640 = vpop.f32.mrf.mxu0
        %v641 = vadd.f32 %v239, %v640
        %v642 = vpop.f32.mrf.mxu0
        %v643 = vadd.f32 %v239, %v642
        %644 = vmatprep.mubr.f32.mxu0 0.0
        %645 = vmatmul.mubr.f32.gmra.mxu0 %v277
        %v646 = vpop.f32.mrf.mxu0
        %v647 = vadd.f32 %v244, %v646
        %v648 = vpop.f32.mrf.mxu0
        %v649 = vadd.f32 %v244, %v648
        %650 = vdwg.mxu0
        %651 = vmatprep.subr.mxu0 0.0
        %652 = vmatpush1.msra.mxu0 0.0
        %653 = vmatprep.subr.mxu0 0.0
        %654 = vmatpush1.msra.mxu0 0.0
        %655 = vmatprep.subr.mxu0 0.0
        %656 = vmatpush1.msra.mxu0 0.0
        %657 = vmatprep.subr.mxu0 0.0
        %658 = vmatpush1.msra.mxu0 0.0
        %659 = vmatprep.subr.mxu0 0.0
        %660 = vmatpush1.msra.mxu0 0.0
        %661 = vmatprep.subr.mxu0 0.0
        %662 = vmatpush1.msra.mxu0 0.0
        %663 = vmatprep.subr.mxu0 0.0
        %664 = vmatpush1.msra.mxu0 0.0
        %665 = vmatprep.subr.mxu0 0.0
        %666 = vmatpush1.msra.mxu0 0.0
        %667 = vmatprep.subr.mxu0 0.0
        %668 = vmatpush1.msra.mxu0 0.0
        %669 = vmatprep.subr.mxu0 0.0
        %670 = vmatpush1.msra.mxu0 0.0
        %671 = vmatprep.subr.mxu0 0.0
        %672 = vmatpush1.msra.mxu0 0.0
        %673 = vmatprep.subr.mxu0 0.0
        %674 = vmatpush1.msra.mxu0 0.0
        %675 = vmatprep.subr.mxu0 0.0
        %676 = vmatpush1.msra.mxu0 0.0
        %677 = vmatprep.subr.mxu0 0.0
        %678 = vmatpush1.msra.mxu0 0.0
        %679 = vmatprep.subr.mxu0 0.0
        %680 = vmatpush1.msra.mxu0 0.0
        %681 = vmatprep.subr.mxu0 %v294
        %682 = vmatpush1.msra.mxu0 %v292
        %683 = vmatprep.subr.mxu0 0.0
        %684 = vmatpush2.msra.mxu0 0.0
        %685 = vmatprep.subr.mxu0 0.0
        %686 = vmatpush2.msra.mxu0 0.0
        %687 = vmatprep.subr.mxu0 0.0
        %688 = vmatpush2.msra.mxu0 0.0
        %689 = vmatprep.subr.mxu0 0.0
        %690 = vmatpush2.msra.mxu0 0.0
        %691 = vmatprep.subr.mxu0 0.0
        %692 = vmatpush2.msra.mxu0 0.0
        %693 = vmatprep.subr.mxu0 0.0
        %694 = vmatpush2.msra.mxu0 0.0
        %695 = vmatprep.subr.mxu0 0.0
        %696 = vmatpush2.msra.mxu0 0.0
        %697 = vmatprep.subr.mxu0 0.0
        %698 = vmatpush2.msra.mxu0 0.0
        %699 = vmatprep.subr.mxu0 0.0
        %700 = vmatpush2.msra.mxu0 0.0
        %701 = vmatprep.subr.mxu0 0.0
        %702 = vmatpush2.msra.mxu0 0.0
        %703 = vmatprep.subr.mxu0 0.0
        %704 = vmatpush2.msra.mxu0 0.0
        %705 = vmatprep.subr.mxu0 0.0
        %706 = vmatpush2.msra.mxu0 0.0
        %707 = vmatprep.subr.mxu0 0.0
        %708 = vmatpush2.msra.mxu0 0.0
        %709 = vmatprep.subr.mxu0 0.0
        %710 = vmatpush2.msra.mxu0 0.0
        %711 = vmatprep.subr.mxu0 0.0
        %712 = vmatpush2.msra.mxu0 0.0
        %713 = vmatprep.subr.mxu0 0.0
        %714 = vmatpush2.msra.mxu0 0.0
        %715 = vmatprep.mubr.f32.mxu0 0.0
        %716 = vmatmul.mubr.f32.gmra.mxu0 %v263
        %v717 = vpop.f32.mrf.mxu0
        %v718 = vadd.f32 %v209, %v717
        %v719 = vpop.f32.mrf.mxu0
        %v720 = vadd.f32 %v209, %v719
        %721 = vmatprep.mubr.f32.mxu0 0.0
        %722 = vmatmul.mubr.f32.gmra.mxu0 %v265
        %v723 = vpop.f32.mrf.mxu0
        %v724 = vadd.f32 %v214, %v723
        %v725 = vpop.f32.mrf.mxu0
        %v726 = vadd.f32 %v214, %v725
        %727 = vmatprep.mubr.f32.mxu0 0.0
        %728 = vmatmul.mubr.f32.gmra.mxu0 %v267
        %v729 = vpop.f32.mrf.mxu0
        %v730 = vadd.f32 %v219, %v729
        %v731 = vpop.f32.mrf.mxu0
        %v732 = vadd.f32 %v219, %v731
        %733 = vmatprep.mubr.f32.mxu0 0.0
        %734 = vmatmul.mubr.f32.gmra.mxu0 %v269
        %v735 = vpop.f32.mrf.mxu0
        %v736 = vadd.f32 %v224, %v735
        %v737 = vpop.f32.mrf.mxu0
        %v738 = vadd.f32 %v224, %v737
        %739 = vmatprep.mubr.f32.mxu0 0.0
        %740 = vmatmul.mubr.f32.gmra.mxu0 %v271
        %v741 = vpop.f32.mrf.mxu0
        %v742 = vadd.f32 %v229, %v741
        %v743 = vpop.f32.mrf.mxu0
        %v744 = vadd.f32 %v229, %v743
        %745 = vmatprep.mubr.f32.mxu0 0.0
        %746 = vmatmul.mubr.f32.gmra.mxu0 %v273
        %v747 = vpop.f32.mrf.mxu0
        %v748 = vadd.f32 %v234, %v747
        %v749 = vpop.f32.mrf.mxu0
        %v750 = vadd.f32 %v234, %v749
        %751 = vmatprep.mubr.f32.mxu0 0.0
        %752 = vmatmul.mubr.f32.gmra.mxu0 %v275
        %v753 = vpop.f32.mrf.mxu0
        %v754 = vadd.f32 %v239, %v753
        %v755 = vpop.f32.mrf.mxu0
        %v756 = vadd.f32 %v239, %v755
        %757 = vmatprep.mubr.f32.mxu0 0.0
        %758 = vmatmul.mubr.f32.gmra.mxu0 %v277
        %v759 = vpop.f32.mrf.mxu0
        %v760 = vadd.f32 %v244, %v759
        %v761 = vpop.f32.mrf.mxu0
        %v762 = vadd.f32 %v244, %v761
        %763 = vdwg.mxu0
        %764 = vmatprep.subr.mxu0 0.0
        %765 = vmatpush1.msra.mxu0 0.0
        %766 = vmatprep.subr.mxu0 0.0
        %767 = vmatpush1.msra.mxu0 0.0
        %768 = vmatprep.subr.mxu0 0.0
        %769 = vmatpush1.msra.mxu0 0.0
        %770 = vmatprep.subr.mxu0 0.0
        %771 = vmatpush1.msra.mxu0 0.0
        %772 = vmatprep.subr.mxu0 0.0
        %773 = vmatpush1.msra.mxu0 0.0
        %774 = vmatprep.subr.mxu0 0.0
        %775 = vmatpush1.msra.mxu0 0.0
        %776 = vmatprep.subr.mxu0 0.0
        %777 = vmatpush1.msra.mxu0 0.0
        %778 = vmatprep.subr.mxu0 0.0
        %779 = vmatpush1.msra.mxu0 0.0
        %780 = vmatprep.subr.mxu0 0.0
        %781 = vmatpush1.msra.mxu0 0.0
        %782 = vmatprep.subr.mxu0 0.0
        %783 = vmatpush1.msra.mxu0 0.0
        %784 = vmatprep.subr.mxu0 0.0
        %785 = vmatpush1.msra.mxu0 0.0
        %786 = vmatprep.subr.mxu0 0.0
        %787 = vmatpush1.msra.mxu0 0.0
        %788 = vmatprep.subr.mxu0 0.0
        %789 = vmatpush1.msra.mxu0 0.0
        %790 = vmatprep.subr.mxu0 0.0
        %791 = vmatpush1.msra.mxu0 0.0
        %792 = vmatprep.subr.mxu0 0.0
        %793 = vmatpush1.msra.mxu0 0.0
        %794 = vmatprep.subr.mxu0 %v298
        %795 = vmatpush1.msra.mxu0 %v296
        %796 = vmatprep.subr.mxu0 0.0
        %797 = vmatpush2.msra.mxu0 0.0
        %798 = vmatprep.subr.mxu0 0.0
        %799 = vmatpush2.msra.mxu0 0.0
        %800 = vmatprep.subr.mxu0 0.0
        %801 = vmatpush2.msra.mxu0 0.0
        %802 = vmatprep.subr.mxu0 0.0
        %803 = vmatpush2.msra.mxu0 0.0
        %804 = vmatprep.subr.mxu0 0.0
        %805 = vmatpush2.msra.mxu0 0.0
        %806 = vmatprep.subr.mxu0 0.0
        %807 = vmatpush2.msra.mxu0 0.0
        %808 = vmatprep.subr.mxu0 0.0
        %809 = vmatpush2.msra.mxu0 0.0
        %810 = vmatprep.subr.mxu0 0.0
        %811 = vmatpush2.msra.mxu0 0.0
        %812 = vmatprep.subr.mxu0 0.0
        %813 = vmatpush2.msra.mxu0 0.0
        %814 = vmatprep.subr.mxu0 0.0
        %815 = vmatpush2.msra.mxu0 0.0
        %816 = vmatprep.subr.mxu0 0.0
        %817 = vmatpush2.msra.mxu0 0.0
        %818 = vmatprep.subr.mxu0 0.0
        %819 = vmatpush2.msra.mxu0 0.0
        %820 = vmatprep.subr.mxu0 0.0
        %821 = vmatpush2.msra.mxu0 0.0
        %822 = vmatprep.subr.mxu0 0.0
        %823 = vmatpush2.msra.mxu0 0.0
        %824 = vmatprep.subr.mxu0 0.0
        %825 = vmatpush2.msra.mxu0 0.0
        %826 = vmatprep.subr.mxu0 0.0
        %827 = vmatpush2.msra.mxu0 0.0
        %828 = vmatprep.mubr.f32.mxu0 0.0
        %829 = vmatmul.mubr.f32.gmra.mxu0 %v263
        %v830 = vpop.f32.mrf.mxu0
        %v831 = vadd.f32 %v209, %v830
        %v832 = vpop.f32.mrf.mxu0
        %v833 = vadd.f32 %v209, %v832
        %834 = vmatprep.mubr.f32.mxu0 0.0
        %835 = vmatmul.mubr.f32.gmra.mxu0 %v265
        %v836 = vpop.f32.mrf.mxu0
        %v837 = vadd.f32 %v214, %v836
        %v838 = vpop.f32.mrf.mxu0
        %v839 = vadd.f32 %v214, %v838
        %840 = vmatprep.mubr.f32.mxu0 0.0
        %841 = vmatmul.mubr.f32.gmra.mxu0 %v267
        %v842 = vpop.f32.mrf.mxu0
        %v843 = vadd.f32 %v219, %v842
        %v844 = vpop.f32.mrf.mxu0
        %v845 = vadd.f32 %v219, %v844
        %846 = vmatprep.mubr.f32.mxu0 0.0
        %847 = vmatmul.mubr.f32.gmra.mxu0 %v269
        %v848 = vpop.f32.mrf.mxu0
        %v849 = vadd.f32 %v224, %v848
        %v850 = vpop.f32.mrf.mxu0
        %v851 = vadd.f32 %v224, %v850
        %852 = vmatprep.mubr.f32.mxu0 0.0
        %853 = vmatmul.mubr.f32.gmra.mxu0 %v271
        %v854 = vpop.f32.mrf.mxu0
        %v855 = vadd.f32 %v229, %v854
        %v856 = vpop.f32.mrf.mxu0
        %v857 = vadd.f32 %v229, %v856
        %858 = vmatprep.mubr.f32.mxu0 0.0
        %859 = vmatmul.mubr.f32.gmra.mxu0 %v273
        %v860 = vpop.f32.mrf.mxu0
        %v861 = vadd.f32 %v234, %v860
        %v862 = vpop.f32.mrf.mxu0
        %v863 = vadd.f32 %v234, %v862
        %864 = vmatprep.mubr.f32.mxu0 0.0
        %865 = vmatmul.mubr.f32.gmra.mxu0 %v275
        %v866 = vpop.f32.mrf.mxu0
        %v867 = vadd.f32 %v239, %v866
        %v868 = vpop.f32.mrf.mxu0
        %v869 = vadd.f32 %v239, %v868
        %870 = vmatprep.mubr.f32.mxu0 0.0
        %871 = vmatmul.mubr.f32.gmra.mxu0 %v277
        %v872 = vpop.f32.mrf.mxu0
        %v873 = vadd.f32 %v244, %v872
        %v874 = vpop.f32.mrf.mxu0
        %v875 = vadd.f32 %v244, %v874
        %876 = vdwg.mxu0
        %877 = vmatprep.subr.mxu0 0.0
        %878 = vmatpush1.msra.mxu0 0.0
        %879 = vmatprep.subr.mxu0 0.0
        %880 = vmatpush1.msra.mxu0 0.0
        %881 = vmatprep.subr.mxu0 0.0
        %882 = vmatpush1.msra.mxu0 0.0
        %883 = vmatprep.subr.mxu0 0.0
        %884 = vmatpush1.msra.mxu0 0.0
        %885 = vmatprep.subr.mxu0 0.0
        %886 = vmatpush1.msra.mxu0 0.0
        %887 = vmatprep.subr.mxu0 0.0
        %888 = vmatpush1.msra.mxu0 0.0
        %889 = vmatprep.subr.mxu0 0.0
        %890 = vmatpush1.msra.mxu0 0.0
        %891 = vmatprep.subr.mxu0 0.0
        %892 = vmatpush1.msra.mxu0 0.0
        %893 = vmatprep.subr.mxu0 0.0
        %894 = vmatpush1.msra.mxu0 0.0
        %895 = vmatprep.subr.mxu0 0.0
        %896 = vmatpush1.msra.mxu0 0.0
        %897 = vmatprep.subr.mxu0 0.0
        %898 = vmatpush1.msra.mxu0 0.0
        %899 = vmatprep.subr.mxu0 0.0
        %900 = vmatpush1.msra.mxu0 0.0
        %901 = vmatprep.subr.mxu0 0.0
        %902 = vmatpush1.msra.mxu0 0.0
        %903 = vmatprep.subr.mxu0 0.0
        %904 = vmatpush1.msra.mxu0 0.0
        %905 = vmatprep.subr.mxu0 0.0
        %906 = vmatpush1.msra.mxu0 0.0
        %907 = vmatprep.subr.mxu0 %v302
        %908 = vmatpush1.msra.mxu0 %v300
        %909 = vmatprep.subr.mxu0 0.0
        %910 = vmatpush2.msra.mxu0 0.0
        %911 = vmatprep.subr.mxu0 0.0
        %912 = vmatpush2.msra.mxu0 0.0
        %913 = vmatprep.subr.mxu0 0.0
        %914 = vmatpush2.msra.mxu0 0.0
        %915 = vmatprep.subr.mxu0 0.0
        %916 = vmatpush2.msra.mxu0 0.0
        %917 = vmatprep.subr.mxu0 0.0
        %918 = vmatpush2.msra.mxu0 0.0
        %919 = vmatprep.subr.mxu0 0.0
        %920 = vmatpush2.msra.mxu0 0.0
        %921 = vmatprep.subr.mxu0 0.0
        %922 = vmatpush2.msra.mxu0 0.0
        %923 = vmatprep.subr.mxu0 0.0
        %924 = vmatpush2.msra.mxu0 0.0
        %925 = vmatprep.subr.mxu0 0.0
        %926 = vmatpush2.msra.mxu0 0.0
        %927 = vmatprep.subr.mxu0 0.0
        %928 = vmatpush2.msra.mxu0 0.0
        %929 = vmatprep.subr.mxu0 0.0
        %930 = vmatpush2.msra.mxu0 0.0
        %931 = vmatprep.subr.mxu0 0.0
        %932 = vmatpush2.msra.mxu0 0.0
        %933 = vmatprep.subr.mxu0 0.0
        %934 = vmatpush2.msra.mxu0 0.0
        %935 = vmatprep.subr.mxu0 0.0
        %936 = vmatpush2.msra.mxu0 0.0
        %937 = vmatprep.subr.mxu0 0.0
        %938 = vmatpush2.msra.mxu0 0.0
        %939 = vmatprep.subr.mxu0 0.0
        %940 = vmatpush2.msra.mxu0 0.0
        %941 = vmatprep.mubr.f32.mxu0 0.0
        %942 = vmatmul.mubr.f32.gmra.mxu0 %v263
        %v943 = vpop.f32.mrf.mxu0
        %v944 = vadd.f32 %v209, %v943
        %v945 = vpop.f32.mrf.mxu0
        %v946 = vadd.f32 %v209, %v945
        %947 = vmatprep.mubr.f32.mxu0 0.0
        %948 = vmatmul.mubr.f32.gmra.mxu0 %v265
        %v949 = vpop.f32.mrf.mxu0
        %v950 = vadd.f32 %v214, %v949
        %v951 = vpop.f32.mrf.mxu0
        %v952 = vadd.f32 %v214, %v951
        %953 = vmatprep.mubr.f32.mxu0 0.0
        %954 = vmatmul.mubr.f32.gmra.mxu0 %v267
        %v955 = vpop.f32.mrf.mxu0
        %v956 = vadd.f32 %v219, %v955
        %v957 = vpop.f32.mrf.mxu0
        %v958 = vadd.f32 %v219, %v957
        %959 = vmatprep.mubr.f32.mxu0 0.0
        %960 = vmatmul.mubr.f32.gmra.mxu0 %v269
        %v961 = vpop.f32.mrf.mxu0
        %v962 = vadd.f32 %v224, %v961
        %v963 = vpop.f32.mrf.mxu0
        %v964 = vadd.f32 %v224, %v963
        %965 = vmatprep.mubr.f32.mxu0 0.0
        %966 = vmatmul.mubr.f32.gmra.mxu0 %v271
        %v967 = vpop.f32.mrf.mxu0
        %v968 = vadd.f32 %v229, %v967
        %v969 = vpop.f32.mrf.mxu0
        %v970 = vadd.f32 %v229, %v969
        %971 = vmatprep.mubr.f32.mxu0 0.0
        %972 = vmatmul.mubr.f32.gmra.mxu0 %v273
        %v973 = vpop.f32.mrf.mxu0
        %v974 = vadd.f32 %v234, %v973
        %v975 = vpop.f32.mrf.mxu0
        %v976 = vadd.f32 %v234, %v975
        %977 = vmatprep.mubr.f32.mxu0 0.0
        %978 = vmatmul.mubr.f32.gmra.mxu0 %v275
        %v979 = vpop.f32.mrf.mxu0
        %v980 = vadd.f32 %v239, %v979
        %v981 = vpop.f32.mrf.mxu0
        %v982 = vadd.f32 %v239, %v981
        %983 = vmatprep.mubr.f32.mxu0 0.0
        %984 = vmatmul.mubr.f32.gmra.mxu0 %v277
        %v985 = vpop.f32.mrf.mxu0
        %v986 = vadd.f32 %v244, %v985
        %v987 = vpop.f32.mrf.mxu0
        %v988 = vadd.f32 %v244, %v987
        %989 = vdwg.mxu0
        %990 = vmatprep.subr.mxu0 0.0
        %991 = vmatpush1.msra.mxu0 0.0
        %992 = vmatprep.subr.mxu0 0.0
        %993 = vmatpush1.msra.mxu0 0.0
        %994 = vmatprep.subr.mxu0 0.0
        %995 = vmatpush1.msra.mxu0 0.0
        %996 = vmatprep.subr.mxu0 0.0
        %997 = vmatpush1.msra.mxu0 0.0
        %998 = vmatprep.subr.mxu0 0.0
        %999 = vmatpush1.msra.mxu0 0.0
        %1000 = vmatprep.subr.mxu0 0.0
        %1001 = vmatpush1.msra.mxu0 0.0
        %1002 = vmatprep.subr.mxu0 0.0
        %1003 = vmatpush1.msra.mxu0 0.0
        %1004 = vmatprep.subr.mxu0 0.0
        %1005 = vmatpush1.msra.mxu0 0.0
        %1006 = vmatprep.subr.mxu0 0.0
        %1007 = vmatpush1.msra.mxu0 0.0
        %1008 = vmatprep.subr.mxu0 0.0
        %1009 = vmatpush1.msra.mxu0 0.0
        %1010 = vmatprep.subr.mxu0 0.0
        %1011 = vmatpush1.msra.mxu0 0.0
        %1012 = vmatprep.subr.mxu0 0.0
        %1013 = vmatpush1.msra.mxu0 0.0
        %1014 = vmatprep.subr.mxu0 0.0
        %1015 = vmatpush1.msra.mxu0 0.0
        %1016 = vmatprep.subr.mxu0 0.0
        %1017 = vmatpush1.msra.mxu0 0.0
        %1018 = vmatprep.subr.mxu0 0.0
        %1019 = vmatpush1.msra.mxu0 0.0
        %1020 = vmatprep.subr.mxu0 %v306
        %1021 = vmatpush1.msra.mxu0 %v304
        %1022 = vmatprep.subr.mxu0 0.0
        %1023 = vmatpush2.msra.mxu0 0.0
        %1024 = vmatprep.subr.mxu0 0.0
        %1025 = vmatpush2.msra.mxu0 0.0
        %1026 = vmatprep.subr.mxu0 0.0
        %1027 = vmatpush2.msra.mxu0 0.0
        %1028 = vmatprep.subr.mxu0 0.0
        %1029 = vmatpush2.msra.mxu0 0.0
        %1030 = vmatprep.subr.mxu0 0.0
        %1031 = vmatpush2.msra.mxu0 0.0
        %1032 = vmatprep.subr.mxu0 0.0
        %1033 = vmatpush2.msra.mxu0 0.0
        %1034 = vmatprep.subr.mxu0 0.0
        %1035 = vmatpush2.msra.mxu0 0.0
        %1036 = vmatprep.subr.mxu0 0.0
        %1037 = vmatpush2.msra.mxu0 0.0
        %1038 = vmatprep.subr.mxu0 0.0
        %1039 = vmatpush2.msra.mxu0 0.0
        %1040 = vmatprep.subr.mxu0 0.0
        %1041 = vmatpush2.msra.mxu0 0.0
        %1042 = vmatprep.subr.mxu0 0.0
        %1043 = vmatpush2.msra.mxu0 0.0
        %1044 = vmatprep.subr.mxu0 0.0
        %1045 = vmatpush2.msra.mxu0 0.0
        %1046 = vmatprep.subr.mxu0 0.0
        %1047 = vmatpush2.msra.mxu0 0.0
        %1048 = vmatprep.subr.mxu0 0.0
        %1049 = vmatpush2.msra.mxu0 0.0
        %1050 = vmatprep.subr.mxu0 0.0
        %1051 = vmatpush2.msra.mxu0 0.0
        %1052 = vmatprep.subr.mxu0 0.0
        %1053 = vmatpush2.msra.mxu0 0.0
        %1054 = vmatprep.mubr.f32.mxu0 0.0
        %1055 = vmatmul.mubr.f32.gmra.mxu0 %v263
        %v1056 = vpop.f32.mrf.mxu0
        %v1057 = vadd.f32 %v209, %v1056
        %v1058 = vpop.f32.mrf.mxu0
        %v1059 = vadd.f32 %v209, %v1058
        %1060 = vmatprep.mubr.f32.mxu0 0.0
        %1061 = vmatmul.mubr.f32.gmra.mxu0 %v265
        %v1062 = vpop.f32.mrf.mxu0
        %v1063 = vadd.f32 %v214, %v1062
        %v1064 = vpop.f32.mrf.mxu0
        %v1065 = vadd.f32 %v214, %v1064
        %1066 = vmatprep.mubr.f32.mxu0 0.0
        %1067 = vmatmul.mubr.f32.gmra.mxu0 %v267
        %v1068 = vpop.f32.mrf.mxu0
        %v1069 = vadd.f32 %v219, %v1068
        %v1070 = vpop.f32.mrf.mxu0
        %v1071 = vadd.f32 %v219, %v1070
        %1072 = vmatprep.mubr.f32.mxu0 0.0
        %1073 = vmatmul.mubr.f32.gmra.mxu0 %v269
        %v1074 = vpop.f32.mrf.mxu0
        %v1075 = vadd.f32 %v224, %v1074
        %v1076 = vpop.f32.mrf.mxu0
        %v1077 = vadd.f32 %v224, %v1076
        %1078 = vmatprep.mubr.f32.mxu0 0.0
        %1079 = vmatmul.mubr.f32.gmra.mxu0 %v271
        %v1080 = vpop.f32.mrf.mxu0
        %v1081 = vadd.f32 %v229, %v1080
        %v1082 = vpop.f32.mrf.mxu0
        %v1083 = vadd.f32 %v229, %v1082
        %1084 = vmatprep.mubr.f32.mxu0 0.0
        %1085 = vmatmul.mubr.f32.gmra.mxu0 %v273
        %v1086 = vpop.f32.mrf.mxu0
        %v1087 = vadd.f32 %v234, %v1086
        %v1088 = vpop.f32.mrf.mxu0
        %v1089 = vadd.f32 %v234, %v1088
        %1090 = vmatprep.mubr.f32.mxu0 0.0
        %1091 = vmatmul.mubr.f32.gmra.mxu0 %v275
        %v1092 = vpop.f32.mrf.mxu0
        %v1093 = vadd.f32 %v239, %v1092
        %v1094 = vpop.f32.mrf.mxu0
        %v1095 = vadd.f32 %v239, %v1094
        %1096 = vmatprep.mubr.f32.mxu0 0.0
        %1097 = vmatmul.mubr.f32.gmra.mxu0 %v277
        %v1098 = vpop.f32.mrf.mxu0
        %v1099 = vadd.f32 %v244, %v1098
        %v1100 = vpop.f32.mrf.mxu0
        %v1101 = vadd.f32 %v244, %v1100
        %1102 = vdwg.mxu0
        %1103 = vmatprep.subr.mxu0 0.0
        %1104 = vmatpush1.msra.mxu0 0.0
        %1105 = vmatprep.subr.mxu0 0.0
        %1106 = vmatpush1.msra.mxu0 0.0
        %1107 = vmatprep.subr.mxu0 0.0
        %1108 = vmatpush1.msra.mxu0 0.0
        %1109 = vmatprep.subr.mxu0 0.0
        %1110 = vmatpush1.msra.mxu0 0.0
        %1111 = vmatprep.subr.mxu0 0.0
        %1112 = vmatpush1.msra.mxu0 0.0
        %1113 = vmatprep.subr.mxu0 0.0
        %1114 = vmatpush1.msra.mxu0 0.0
        %1115 = vmatprep.subr.mxu0 0.0
        %1116 = vmatpush1.msra.mxu0 0.0
        %1117 = vmatprep.subr.mxu0 0.0
        %1118 = vmatpush1.msra.mxu0 0.0
        %1119 = vmatprep.subr.mxu0 0.0
        %1120 = vmatpush1.msra.mxu0 0.0
        %1121 = vmatprep.subr.mxu0 0.0
        %1122 = vmatpush1.msra.mxu0 0.0
        %1123 = vmatprep.subr.mxu0 0.0
        %1124 = vmatpush1.msra.mxu0 0.0
        %1125 = vmatprep.subr.mxu0 0.0
        %1126 = vmatpush1.msra.mxu0 0.0
        %1127 = vmatprep.subr.mxu0 0.0
        %1128 = vmatpush1.msra.mxu0 0.0
        %1129 = vmatprep.subr.mxu0 0.0
        %1130 = vmatpush1.msra.mxu0 0.0
        %1131 = vmatprep.subr.mxu0 0.0
        %1132 = vmatpush1.msra.mxu0 0.0
        %1133 = vmatprep.subr.mxu0 %v310
        %1134 = vmatpush1.msra.mxu0 %v308
        %1135 = vmatprep.subr.mxu0 0.0
        %1136 = vmatpush2.msra.mxu0 0.0
        %1137 = vmatprep.subr.mxu0 0.0
        %1138 = vmatpush2.msra.mxu0 0.0
        %1139 = vmatprep.subr.mxu0 0.0
        %1140 = vmatpush2.msra.mxu0 0.0
        %1141 = vmatprep.subr.mxu0 0.0
        %1142 = vmatpush2.msra.mxu0 0.0
        %1143 = vmatprep.subr.mxu0 0.0
        %1144 = vmatpush2.msra.mxu0 0.0
        %1145 = vmatprep.subr.mxu0 0.0
        %1146 = vmatpush2.msra.mxu0 0.0
        %1147 = vmatprep.subr.mxu0 0.0
        %1148 = vmatpush2.msra.mxu0 0.0
        %1149 = vmatprep.subr.mxu0 0.0
        %1150 = vmatpush2.msra.mxu0 0.0
        %1151 = vmatprep.subr.mxu0 0.0
        %1152 = vmatpush2.msra.mxu0 0.0
        %1153 = vmatprep.subr.mxu0 0.0
        %1154 = vmatpush2.msra.mxu0 0.0
        %1155 = vmatprep.subr.mxu0 0.0
        %1156 = vmatpush2.msra.mxu0 0.0
        %1157 = vmatprep.subr.mxu0 0.0
        %1158 = vmatpush2.msra.mxu0 0.0
        %1159 = vmatprep.subr.mxu0 0.0
        %1160 = vmatpush2.msra.mxu0 0.0
        %1161 = vmatprep.subr.mxu0 0.0
        %1162 = vmatpush2.msra.mxu0 0.0
        %1163 = vmatprep.subr.mxu0 0.0
        %1164 = vmatpush2.msra.mxu0 0.0
        %1165 = vmatprep.subr.mxu0 0.0
        %1166 = vmatpush2.msra.mxu0 0.0
        %1167 = vmatprep.mubr.f32.mxu0 0.0
        %1168 = vmatmul.mubr.f32.gmra.mxu0 %v263
        %v1169 = vpop.f32.mrf.mxu0
        %v1170 = vadd.f32 %v209, %v1169
        %v1171 = vpop.f32.mrf.mxu0
        %v1172 = vadd.f32 %v209, %v1171
        %1173 = vmatprep.mubr.f32.mxu0 0.0
        %1174 = vmatmul.mubr.f32.gmra.mxu0 %v265
        %v1175 = vpop.f32.mrf.mxu0
        %v1176 = vadd.f32 %v214, %v1175
        %v1177 = vpop.f32.mrf.mxu0
        %v1178 = vadd.f32 %v214, %v1177
        %1179 = vmatprep.mubr.f32.mxu0 0.0
        %1180 = vmatmul.mubr.f32.gmra.mxu0 %v267
        %v1181 = vpop.f32.mrf.mxu0
        %v1182 = vadd.f32 %v219, %v1181
        %v1183 = vpop.f32.mrf.mxu0
        %v1184 = vadd.f32 %v219, %v1183
        %1185 = vmatprep.mubr.f32.mxu0 0.0
        %1186 = vmatmul.mubr.f32.gmra.mxu0 %v269
        %v1187 = vpop.f32.mrf.mxu0
        %v1188 = vadd.f32 %v224, %v1187
        %v1189 = vpop.f32.mrf.mxu0
        %v1190 = vadd.f32 %v224, %v1189
        %1191 = vmatprep.mubr.f32.mxu0 0.0
        %1192 = vmatmul.mubr.f32.gmra.mxu0 %v271
        %v1193 = vpop.f32.mrf.mxu0
        %v1194 = vadd.f32 %v229, %v1193
        %v1195 = vpop.f32.mrf.mxu0
        %v1196 = vadd.f32 %v229, %v1195
        %1197 = vmatprep.mubr.f32.mxu0 0.0
        %1198 = vmatmul.mubr.f32.gmra.mxu0 %v273
        %v1199 = vpop.f32.mrf.mxu0
        %v1200 = vadd.f32 %v234, %v1199
        %v1201 = vpop.f32.mrf.mxu0
        %v1202 = vadd.f32 %v234, %v1201
        %1203 = vmatprep.mubr.f32.mxu0 0.0
        %1204 = vmatmul.mubr.f32.gmra.mxu0 %v275
        %v1205 = vpop.f32.mrf.mxu0
        %v1206 = vadd.f32 %v239, %v1205
        %v1207 = vpop.f32.mrf.mxu0
        %v1208 = vadd.f32 %v239, %v1207
        %1209 = vmatprep.mubr.f32.mxu0 0.0
        %1210 = vmatmul.mubr.f32.gmra.mxu0 %v277
        %v1211 = vpop.f32.mrf.mxu0
        %v1212 = vadd.f32 %v244, %v1211
        %v1213 = vpop.f32.mrf.mxu0
        %v1214 = vadd.f32 %v244, %v1213
        %1215 = vdwg.mxu0
        %v1216 = vmax.f32 %v379, 0.0
        %v1217 = vmax.f32 %v381, 0.0
        %v1218 = vmax.f32 %v492, 0.0
        %v1219 = vmax.f32 %v494, 0.0
        %v1220 = vmax.f32 %v605, 0.0
        %v1221 = vmax.f32 %v607, 0.0
        %v1222 = vmax.f32 %v718, 0.0
        %v1223 = vmax.f32 %v720, 0.0
        %v1224 = vmax.f32 %v831, 0.0
        %v1225 = vmax.f32 %v833, 0.0
        %v1226 = vmax.f32 %v944, 0.0
        %v1227 = vmax.f32 %v946, 0.0
        %v1228 = vmax.f32 %v1057, 0.0
        %v1229 = vmax.f32 %v1059, 0.0
        %v1230 = vmax.f32 %v1170, 0.0
        %v1231 = vmax.f32 %v1172, 0.0
        %v1232 = vmax.f32 %v385, 0.0
        %v1233 = vmax.f32 %v387, 0.0
        %v1234 = vmax.f32 %v498, 0.0
        %v1235 = vmax.f32 %v500, 0.0
        %v1236 = vmax.f32 %v611, 0.0
        %v1237 = vmax.f32 %v613, 0.0
        %v1238 = vmax.f32 %v724, 0.0
        %v1239 = vmax.f32 %v726, 0.0
        %v1240 = vmax.f32 %v837, 0.0
        %v1241 = vmax.f32 %v839, 0.0
        %v1242 = vmax.f32 %v950, 0.0
        %v1243 = vmax.f32 %v952, 0.0
        %v1244 = vmax.f32 %v1063, 0.0
        %v1245 = vmax.f32 %v1065, 0.0
        %v1246 = vmax.f32 %v1176, 0.0
        %v1247 = vmax.f32 %v1178, 0.0
        %v1248 = vmax.f32 %v391, 0.0
        %v1249 = vmax.f32 %v393, 0.0
        %v1250 = vmax.f32 %v504, 0.0
        %v1251 = vmax.f32 %v506, 0.0
        %v1252 = vmax.f32 %v617, 0.0
        %v1253 = vmax.f32 %v619, 0.0
        %v1254 = vmax.f32 %v730, 0.0
        %v1255 = vmax.f32 %v732, 0.0
        %v1256 = vmax.f32 %v843, 0.0
        %v1257 = vmax.f32 %v845, 0.0
        %v1258 = vmax.f32 %v956, 0.0
        %v1259 = vmax.f32 %v958, 0.0
        %v1260 = vmax.f32 %v1069, 0.0
        %v1261 = vmax.f32 %v1071, 0.0
        %v1262 = vmax.f32 %v1182, 0.0
        %v1263 = vmax.f32 %v1184, 0.0
        %v1264 = vmax.f32 %v397, 0.0
        %v1265 = vmax.f32 %v399, 0.0
        %v1266 = vmax.f32 %v510, 0.0
        %v1267 = vmax.f32 %v512, 0.0
        %v1268 = vmax.f32 %v623, 0.0
        %v1269 = vmax.f32 %v625, 0.0
        %v1270 = vmax.f32 %v736, 0.0
        %v1271 = vmax.f32 %v738, 0.0
        %v1272 = vmax.f32 %v849, 0.0
        %v1273 = vmax.f32 %v851, 0.0
        %v1274 = vmax.f32 %v962, 0.0
        %v1275 = vmax.f32 %v964, 0.0
        %v1276 = vmax.f32 %v1075, 0.0
        %v1277 = vmax.f32 %v1077, 0.0
        %v1278 = vmax.f32 %v1188, 0.0
        %v1279 = vmax.f32 %v1190, 0.0
        %v1280 = vmax.f32 %v403, 0.0
        %v1281 = vmax.f32 %v405, 0.0
        %v1282 = vmax.f32 %v516, 0.0
        %v1283 = vmax.f32 %v518, 0.0
        %v1284 = vmax.f32 %v629, 0.0
        %v1285 = vmax.f32 %v631, 0.0
        %v1286 = vmax.f32 %v742, 0.0
        %v1287 = vmax.f32 %v744, 0.0
        %v1288 = vmax.f32 %v855, 0.0
        %v1289 = vmax.f32 %v857, 0.0
        %v1290 = vmax.f32 %v968, 0.0
        %v1291 = vmax.f32 %v970, 0.0
        %v1292 = vmax.f32 %v1081, 0.0
        %v1293 = vmax.f32 %v1083, 0.0
        %v1294 = vmax.f32 %v1194, 0.0
        %v1295 = vmax.f32 %v1196, 0.0
        %v1296 = vmax.f32 %v409, 0.0
        %v1297 = vmax.f32 %v411, 0.0
        %v1298 = vmax.f32 %v522, 0.0
        %v1299 = vmax.f32 %v524, 0.0
        %v1300 = vmax.f32 %v635, 0.0
        %v1301 = vmax.f32 %v637, 0.0
        %v1302 = vmax.f32 %v748, 0.0
        %v1303 = vmax.f32 %v750, 0.0
        %v1304 = vmax.f32 %v861, 0.0
        %v1305 = vmax.f32 %v863, 0.0
        %v1306 = vmax.f32 %v974, 0.0
        %v1307 = vmax.f32 %v976, 0.0
        %v1308 = vmax.f32 %v1087, 0.0
        %v1309 = vmax.f32 %v1089, 0.0
        %v1310 = vmax.f32 %v1200, 0.0
        %v1311 = vmax.f32 %v1202, 0.0
        %v1312 = vmax.f32 %v415, 0.0
        %v1313 = vmax.f32 %v417, 0.0
        %v1314 = vmax.f32 %v528, 0.0
        %v1315 = vmax.f32 %v530, 0.0
        %v1316 = vmax.f32 %v641, 0.0
        %v1317 = vmax.f32 %v643, 0.0
        %v1318 = vmax.f32 %v754, 0.0
        %v1319 = vmax.f32 %v756, 0.0
        %v1320 = vmax.f32 %v867, 0.0
        %v1321 = vmax.f32 %v869, 0.0
        %v1322 = vmax.f32 %v980, 0.0
        %v1323 = vmax.f32 %v982, 0.0
        %v1324 = vmax.f32 %v1093, 0.0
        %v1325 = vmax.f32 %v1095, 0.0
        %v1326 = vmax.f32 %v1206, 0.0
        %v1327 = vmax.f32 %v1208, 0.0
        %v1328 = vmax.f32 %v421, 0.0
        %v1329 = vmax.f32 %v423, 0.0
        %v1330 = vmax.f32 %v534, 0.0
        %v1331 = vmax.f32 %v536, 0.0
        %v1332 = vmax.f32 %v647, 0.0
        %v1333 = vmax.f32 %v649, 0.0
        %v1334 = vmax.f32 %v760, 0.0
        %v1335 = vmax.f32 %v762, 0.0
        %v1336 = vmax.f32 %v873, 0.0
        %v1337 = vmax.f32 %v875, 0.0
        %v1338 = vmax.f32 %v986, 0.0
        %v1339 = vmax.f32 %v988, 0.0
        %v1340 = vmax.f32 %v1099, 0.0
        %v1341 = vmax.f32 %v1101, 0.0
        %v1342 = vmax.f32 %v1212, 0.0
        %v1343 = vmax.f32 %v1214, 0.0
        %1344 = vset.pattern.permute.xlu0 5
        %1345 = vperm.xlu0 %1344, %v190
        %v1346 = vpop.permute.xlu0 %1345
        %1348 = vset.pattern.permute.xlu0 5
        %1349 = vperm.xlu0 %1348, %v191
        %v1350 = vpop.permute.xlu0 %1349
        %1352 = vset.pattern.permute.xlu0 5
        %1353 = vperm.xlu0 %1352, %v192
        %v1354 = vpop.permute.xlu0 %1353
        %1356 = vset.pattern.permute.xlu0 5
        %1357 = vperm.xlu0 %1356, %v193
        %v1358 = vpop.permute.xlu0 %1357
        %1360 = vset.pattern.permute.xlu0 5
        %1361 = vperm.xlu0 %1360, %v194
        %v1362 = vpop.permute.xlu0 %1361
        %1364 = vset.pattern.permute.xlu0 5
        %1365 = vperm.xlu0 %1364, %v195
        %v1366 = vpop.permute.xlu0 %1365
        %1368 = vset.pattern.permute.xlu0 5
        %1369 = vperm.xlu0 %1368, %v196
        %v1370 = vpop.permute.xlu0 %1369
        %1372 = vset.pattern.permute.xlu0 5
        %1373 = vperm.xlu0 %1372, %v197
        %v1374 = vpop.permute.xlu0 %1373
        %v1376 = vmul.f32 %v1216, %v1346
        %v1377 = vmul.f32 %v1217, %v1346
        %v1378 = vmul.f32 %v1218, %v1346
        %v1379 = vmul.f32 %v1219, %v1346
        %v1380 = vmul.f32 %v1220, %v1346
        %v1381 = vmul.f32 %v1221, %v1346
        %v1382 = vmul.f32 %v1222, %v1346
        %v1383 = vmul.f32 %v1223, %v1346
        %v1384 = vmul.f32 %v1224, %v1346
        %v1385 = vmul.f32 %v1225, %v1346
        %v1386 = vmul.f32 %v1226, %v1346
        %v1387 = vmul.f32 %v1227, %v1346
        %v1388 = vmul.f32 %v1228, %v1346
        %v1389 = vmul.f32 %v1229, %v1346
        %v1390 = vmul.f32 %v1230, %v1346
        %v1391 = vmul.f32 %v1231, %v1346
        %v1392 = vmul.f32 %v1232, %v1350
        %v1393 = vmul.f32 %v1233, %v1350
        %v1394 = vmul.f32 %v1234, %v1350
        %v1395 = vmul.f32 %v1235, %v1350
        %v1396 = vmul.f32 %v1236, %v1350
        %v1397 = vmul.f32 %v1237, %v1350
        %v1398 = vmul.f32 %v1238, %v1350
        %v1399 = vmul.f32 %v1239, %v1350
        %v1400 = vmul.f32 %v1240, %v1350
        %v1401 = vmul.f32 %v1241, %v1350
        %v1402 = vmul.f32 %v1242, %v1350
        %v1403 = vmul.f32 %v1243, %v1350
        %v1404 = vmul.f32 %v1244, %v1350
        %v1405 = vmul.f32 %v1245, %v1350
        %v1406 = vmul.f32 %v1246, %v1350
        %v1407 = vmul.f32 %v1247, %v1350
        %v1408 = vmul.f32 %v1248, %v1354
        %v1409 = vmul.f32 %v1249, %v1354
        %v1410 = vmul.f32 %v1250, %v1354
        %v1411 = vmul.f32 %v1251, %v1354
        %v1412 = vmul.f32 %v1252, %v1354
        %v1413 = vmul.f32 %v1253, %v1354
        %v1414 = vmul.f32 %v1254, %v1354
        %v1415 = vmul.f32 %v1255, %v1354
        %v1416 = vmul.f32 %v1256, %v1354
        %v1417 = vmul.f32 %v1257, %v1354
        %v1418 = vmul.f32 %v1258, %v1354
        %v1419 = vmul.f32 %v1259, %v1354
        %v1420 = vmul.f32 %v1260, %v1354
        %v1421 = vmul.f32 %v1261, %v1354
        %v1422 = vmul.f32 %v1262, %v1354
        %v1423 = vmul.f32 %v1263, %v1354
        %v1424 = vmul.f32 %v1264, %v1358
        %v1425 = vmul.f32 %v1265, %v1358
        %v1426 = vmul.f32 %v1266, %v1358
        %v1427 = vmul.f32 %v1267, %v1358
        %v1428 = vmul.f32 %v1268, %v1358
        %v1429 = vmul.f32 %v1269, %v1358
        %v1430 = vmul.f32 %v1270, %v1358
        %v1431 = vmul.f32 %v1271, %v1358
        %v1432 = vmul.f32 %v1272, %v1358
        %v1433 = vmul.f32 %v1273, %v1358
        %v1434 = vmul.f32 %v1274, %v1358
        %v1435 = vmul.f32 %v1275, %v1358
        %v1436 = vmul.f32 %v1276, %v1358
        %v1437 = vmul.f32 %v1277, %v1358
        %v1438 = vmul.f32 %v1278, %v1358
        %v1439 = vmul.f32 %v1279, %v1358
        %v1440 = vmul.f32 %v1280, %v1362
        %v1441 = vmul.f32 %v1281, %v1362
        %v1442 = vmul.f32 %v1282, %v1362
        %v1443 = vmul.f32 %v1283, %v1362
        %v1444 = vmul.f32 %v1284, %v1362
        %v1445 = vmul.f32 %v1285, %v1362
        %v1446 = vmul.f32 %v1286, %v1362
        %v1447 = vmul.f32 %v1287, %v1362
        %v1448 = vmul.f32 %v1288, %v1362
        %v1449 = vmul.f32 %v1289, %v1362
        %v1450 = vmul.f32 %v1290, %v1362
        %v1451 = vmul.f32 %v1291, %v1362
        %v1452 = vmul.f32 %v1292, %v1362
        %v1453 = vmul.f32 %v1293, %v1362
        %v1454 = vmul.f32 %v1294, %v1362
        %v1455 = vmul.f32 %v1295, %v1362
        %v1456 = vmul.f32 %v1296, %v1366
        %v1457 = vmul.f32 %v1297, %v1366
        %v1458 = vmul.f32 %v1298, %v1366
        %v1459 = vmul.f32 %v1299, %v1366
        %v1460 = vmul.f32 %v1300, %v1366
        %v1461 = vmul.f32 %v1301, %v1366
        %v1462 = vmul.f32 %v1302, %v1366
        %v1463 = vmul.f32 %v1303, %v1366
        %v1464 = vmul.f32 %v1304, %v1366
        %v1465 = vmul.f32 %v1305, %v1366
        %v1466 = vmul.f32 %v1306, %v1366
        %v1467 = vmul.f32 %v1307, %v1366
        %v1468 = vmul.f32 %v1308, %v1366
        %v1469 = vmul.f32 %v1309, %v1366
        %v1470 = vmul.f32 %v1310, %v1366
        %v1471 = vmul.f32 %v1311, %v1366
        %v1472 = vmul.f32 %v1312, %v1370
        %v1473 = vmul.f32 %v1313, %v1370
        %v1474 = vmul.f32 %v1314, %v1370
        %v1475 = vmul.f32 %v1315, %v1370
        %v1476 = vmul.f32 %v1316, %v1370
        %v1477 = vmul.f32 %v1317, %v1370
        %v1478 = vmul.f32 %v1318, %v1370
        %v1479 = vmul.f32 %v1319, %v1370
        %v1480 = vmul.f32 %v1320, %v1370
        %v1481 = vmul.f32 %v1321, %v1370
        %v1482 = vmul.f32 %v1322, %v1370
        %v1483 = vmul.f32 %v1323, %v1370
        %v1484 = vmul.f32 %v1324, %v1370
        %v1485 = vmul.f32 %v1325, %v1370
        %v1486 = vmul.f32 %v1326, %v1370
        %v1487 = vmul.f32 %v1327, %v1370
        %v1488 = vmul.f32 %v1328, %v1374
        %v1489 = vmul.f32 %v1329, %v1374
        %v1490 = vmul.f32 %v1330, %v1374
        %v1491 = vmul.f32 %v1331, %v1374
        %v1492 = vmul.f32 %v1332, %v1374
        %v1493 = vmul.f32 %v1333, %v1374
        %v1494 = vmul.f32 %v1334, %v1374
        %v1495 = vmul.f32 %v1335, %v1374
        %v1496 = vmul.f32 %v1336, %v1374
        %v1497 = vmul.f32 %v1337, %v1374
        %v1498 = vmul.f32 %v1338, %v1374
        %v1499 = vmul.f32 %v1339, %v1374
        %v1500 = vmul.f32 %v1340, %v1374
        %v1501 = vmul.f32 %v1341, %v1374
        %v1502 = vmul.f32 %v1342, %v1374
        %v1503 = vmul.f32 %v1343, %v1374
        %v1504 = vadd.f32 %v1376, %v1392
        %v1505 = vadd.f32 %v1504, %v1408
        %v1506 = vadd.f32 %v1505, %v1424
        %v1507 = vadd.f32 %v1506, %v1440
        %v1508 = vadd.f32 %v1507, %v1456
        %v1509 = vadd.f32 %v1508, %v1472
        %v1510 = vadd.f32 %v1509, %v1488
        %v1511 = vrot.slane %v1510, 4
        %v1512 = vadd.f32 %v1510, %v1511
        %v1513 = vrot.slane %v1512, 2
        %v1514 = vadd.f32 %v1512, %v1513
        %v1515 = vrot.slane %v1514, 1
        %v1516 = vadd.f32 %v1514, %v1515
        %v1517 = vadd.f32 %v1377, %v1393
        %v1518 = vadd.f32 %v1517, %v1409
        %v1519 = vadd.f32 %v1518, %v1425
        %v1520 = vadd.f32 %v1519, %v1441
        %v1521 = vadd.f32 %v1520, %v1457
        %v1522 = vadd.f32 %v1521, %v1473
        %v1523 = vadd.f32 %v1522, %v1489
        %v1524 = vrot.slane %v1523, 4
        %v1525 = vadd.f32 %v1523, %v1524
        %v1526 = vrot.slane %v1525, 2
        %v1527 = vadd.f32 %v1525, %v1526
        %v1528 = vrot.slane %v1527, 1
        %v1529 = vadd.f32 %v1527, %v1528
        %v1530 = vadd.f32 %v1378, %v1394
        %v1531 = vadd.f32 %v1530, %v1410
        %v1532 = vadd.f32 %v1531, %v1426
        %v1533 = vadd.f32 %v1532, %v1442
        %v1534 = vadd.f32 %v1533, %v1458
        %v1535 = vadd.f32 %v1534, %v1474
        %v1536 = vadd.f32 %v1535, %v1490
        %v1537 = vrot.slane %v1536, 4
        %v1538 = vadd.f32 %v1536, %v1537
        %v1539 = vrot.slane %v1538, 2
        %v1540 = vadd.f32 %v1538, %v1539
        %v1541 = vrot.slane %v1540, 1
        %v1542 = vadd.f32 %v1540, %v1541
        %v1543 = vadd.f32 %v1379, %v1395
        %v1544 = vadd.f32 %v1543, %v1411
        %v1545 = vadd.f32 %v1544, %v1427
        %v1546 = vadd.f32 %v1545, %v1443
        %v1547 = vadd.f32 %v1546, %v1459
        %v1548 = vadd.f32 %v1547, %v1475
        %v1549 = vadd.f32 %v1548, %v1491
        %v1550 = vrot.slane %v1549, 4
        %v1551 = vadd.f32 %v1549, %v1550
        %v1552 = vrot.slane %v1551, 2
        %v1553 = vadd.f32 %v1551, %v1552
        %v1554 = vrot.slane %v1553, 1
        %v1555 = vadd.f32 %v1553, %v1554
        %v1556 = vadd.f32 %v1380, %v1396
        %v1557 = vadd.f32 %v1556, %v1412
        %v1558 = vadd.f32 %v1557, %v1428
        %v1559 = vadd.f32 %v1558, %v1444
        %v1560 = vadd.f32 %v1559, %v1460
        %v1561 = vadd.f32 %v1560, %v1476
        %v1562 = vadd.f32 %v1561, %v1492
        %v1563 = vrot.slane %v1562, 4
        %v1564 = vadd.f32 %v1562, %v1563
        %v1565 = vrot.slane %v1564, 2
        %v1566 = vadd.f32 %v1564, %v1565
        %v1567 = vrot.slane %v1566, 1
        %v1568 = vadd.f32 %v1566, %v1567
        %v1569 = vadd.f32 %v1381, %v1397
        %v1570 = vadd.f32 %v1569, %v1413
        %v1571 = vadd.f32 %v1570, %v1429
        %v1572 = vadd.f32 %v1571, %v1445
        %v1573 = vadd.f32 %v1572, %v1461
        %v1574 = vadd.f32 %v1573, %v1477
        %v1575 = vadd.f32 %v1574, %v1493
        %v1576 = vrot.slane %v1575, 4
        %v1577 = vadd.f32 %v1575, %v1576
        %v1578 = vrot.slane %v1577, 2
        %v1579 = vadd.f32 %v1577, %v1578
        %v1580 = vrot.slane %v1579, 1
        %v1581 = vadd.f32 %v1579, %v1580
        %v1582 = vadd.f32 %v1382, %v1398
        %v1583 = vadd.f32 %v1582, %v1414
        %v1584 = vadd.f32 %v1583, %v1430
        %v1585 = vadd.f32 %v1584, %v1446
        %v1586 = vadd.f32 %v1585, %v1462
        %v1587 = vadd.f32 %v1586, %v1478
        %v1588 = vadd.f32 %v1587, %v1494
        %v1589 = vrot.slane %v1588, 4
        %v1590 = vadd.f32 %v1588, %v1589
        %v1591 = vrot.slane %v1590, 2
        %v1592 = vadd.f32 %v1590, %v1591
        %v1593 = vrot.slane %v1592, 1
        %v1594 = vadd.f32 %v1592, %v1593
        %v1595 = vadd.f32 %v1383, %v1399
        %v1596 = vadd.f32 %v1595, %v1415
        %v1597 = vadd.f32 %v1596, %v1431
        %v1598 = vadd.f32 %v1597, %v1447
        %v1599 = vadd.f32 %v1598, %v1463
        %v1600 = vadd.f32 %v1599, %v1479
        %v1601 = vadd.f32 %v1600, %v1495
        %v1602 = vrot.slane %v1601, 4
        %v1603 = vadd.f32 %v1601, %v1602
        %v1604 = vrot.slane %v1603, 2
        %v1605 = vadd.f32 %v1603, %v1604
        %v1606 = vrot.slane %v1605, 1
        %v1607 = vadd.f32 %v1605, %v1606
        %v1608 = vadd.f32 %v1384, %v1400
        %v1609 = vadd.f32 %v1608, %v1416
        %v1610 = vadd.f32 %v1609, %v1432
        %v1611 = vadd.f32 %v1610, %v1448
        %v1612 = vadd.f32 %v1611, %v1464
        %v1613 = vadd.f32 %v1612, %v1480
        %v1614 = vadd.f32 %v1613, %v1496
        %v1615 = vrot.slane %v1614, 4
        %v1616 = vadd.f32 %v1614, %v1615
        %v1617 = vrot.slane %v1616, 2
        %v1618 = vadd.f32 %v1616, %v1617
        %v1619 = vrot.slane %v1618, 1
        %v1620 = vadd.f32 %v1618, %v1619
        %v1621 = vadd.f32 %v1385, %v1401
        %v1622 = vadd.f32 %v1621, %v1417
        %v1623 = vadd.f32 %v1622, %v1433
        %v1624 = vadd.f32 %v1623, %v1449
        %v1625 = vadd.f32 %v1624, %v1465
        %v1626 = vadd.f32 %v1625, %v1481
        %v1627 = vadd.f32 %v1626, %v1497
        %v1628 = vrot.slane %v1627, 4
        %v1629 = vadd.f32 %v1627, %v1628
        %v1630 = vrot.slane %v1629, 2
        %v1631 = vadd.f32 %v1629, %v1630
        %v1632 = vrot.slane %v1631, 1
        %v1633 = vadd.f32 %v1631, %v1632
        %v1634 = vadd.f32 %v1386, %v1402
        %v1635 = vadd.f32 %v1634, %v1418
        %v1636 = vadd.f32 %v1635, %v1434
        %v1637 = vadd.f32 %v1636, %v1450
        %v1638 = vadd.f32 %v1637, %v1466
        %v1639 = vadd.f32 %v1638, %v1482
        %v1640 = vadd.f32 %v1639, %v1498
        %v1641 = vrot.slane %v1640, 4
        %v1642 = vadd.f32 %v1640, %v1641
        %v1643 = vrot.slane %v1642, 2
        %v1644 = vadd.f32 %v1642, %v1643
        %v1645 = vrot.slane %v1644, 1
        %v1646 = vadd.f32 %v1644, %v1645
        %v1647 = vadd.f32 %v1387, %v1403
        %v1648 = vadd.f32 %v1647, %v1419
        %v1649 = vadd.f32 %v1648, %v1435
        %v1650 = vadd.f32 %v1649, %v1451
        %v1651 = vadd.f32 %v1650, %v1467
        %v1652 = vadd.f32 %v1651, %v1483
        %v1653 = vadd.f32 %v1652, %v1499
        %v1654 = vrot.slane %v1653, 4
        %v1655 = vadd.f32 %v1653, %v1654
        %v1656 = vrot.slane %v1655, 2
        %v1657 = vadd.f32 %v1655, %v1656
        %v1658 = vrot.slane %v1657, 1
        %v1659 = vadd.f32 %v1657, %v1658
        %v1660 = vadd.f32 %v1388, %v1404
        %v1661 = vadd.f32 %v1660, %v1420
        %v1662 = vadd.f32 %v1661, %v1436
        %v1663 = vadd.f32 %v1662, %v1452
        %v1664 = vadd.f32 %v1663, %v1468
        %v1665 = vadd.f32 %v1664, %v1484
        %v1666 = vadd.f32 %v1665, %v1500
        %v1667 = vrot.slane %v1666, 4
        %v1668 = vadd.f32 %v1666, %v1667
        %v1669 = vrot.slane %v1668, 2
        %v1670 = vadd.f32 %v1668, %v1669
        %v1671 = vrot.slane %v1670, 1
        %v1672 = vadd.f32 %v1670, %v1671
        %v1673 = vadd.f32 %v1389, %v1405
        %v1674 = vadd.f32 %v1673, %v1421
        %v1675 = vadd.f32 %v1674, %v1437
        %v1676 = vadd.f32 %v1675, %v1453
        %v1677 = vadd.f32 %v1676, %v1469
        %v1678 = vadd.f32 %v1677, %v1485
        %v1679 = vadd.f32 %v1678, %v1501
        %v1680 = vrot.slane %v1679, 4
        %v1681 = vadd.f32 %v1679, %v1680
        %v1682 = vrot.slane %v1681, 2
        %v1683 = vadd.f32 %v1681, %v1682
        %v1684 = vrot.slane %v1683, 1
        %v1685 = vadd.f32 %v1683, %v1684
        %v1686 = vadd.f32 %v1390, %v1406
        %v1687 = vadd.f32 %v1686, %v1422
        %v1688 = vadd.f32 %v1687, %v1438
        %v1689 = vadd.f32 %v1688, %v1454
        %v1690 = vadd.f32 %v1689, %v1470
        %v1691 = vadd.f32 %v1690, %v1486
        %v1692 = vadd.f32 %v1691, %v1502
        %v1693 = vrot.slane %v1692, 4
        %v1694 = vadd.f32 %v1692, %v1693
        %v1695 = vrot.slane %v1694, 2
        %v1696 = vadd.f32 %v1694, %v1695
        %v1697 = vrot.slane %v1696, 1
        %v1698 = vadd.f32 %v1696, %v1697
        %v1699 = vadd.f32 %v1391, %v1407
        %v1700 = vadd.f32 %v1699, %v1423
        %v1701 = vadd.f32 %v1700, %v1439
        %v1702 = vadd.f32 %v1701, %v1455
        %v1703 = vadd.f32 %v1702, %v1471
        %v1704 = vadd.f32 %v1703, %v1487
        %v1705 = vadd.f32 %v1704, %v1503
        %v1706 = vrot.slane %v1705, 4
        %v1707 = vadd.f32 %v1705, %v1706
        %v1708 = vrot.slane %v1707, 2
        %v1709 = vadd.f32 %v1707, %v1708
        %v1710 = vrot.slane %v1709, 1
        %v1711 = vadd.f32 %v1709, %v1710
        %s1712 = sld [smem:[#allocation2]]
        %v1713 = vstv %s1712
        %v1714 = vadd.f32 %v1516, %v1713
        %v1715 = vadd.f32 %v1529, %v1713
        %v1716 = vadd.f32 %v1542, %v1713
        %v1717 = vadd.f32 %v1555, %v1713
        %v1718 = vadd.f32 %v1568, %v1713
        %v1719 = vadd.f32 %v1581, %v1713
        %v1720 = vadd.f32 %v1594, %v1713
        %v1721 = vadd.f32 %v1607, %v1713
        %v1722 = vadd.f32 %v1620, %v1713
        %v1723 = vadd.f32 %v1633, %v1713
        %v1724 = vadd.f32 %v1646, %v1713
        %v1725 = vadd.f32 %v1659, %v1713
        %v1726 = vadd.f32 %v1672, %v1713
        %v1727 = vadd.f32 %v1685, %v1713
        %v1728 = vadd.f32 %v1698, %v1713
        %v1729 = vadd.f32 %v1711, %v1713
        %v1746 = vcombine.low %v1714, %v1715
        %v1747 = vcombine.low %v1716, %v1717
        %v1748 = vcombine.low %v1718, %v1719
        %v1749 = vcombine.low %v1720, %v1721
        %v1751 = vunpack.c.l.s4 1966171168
        %v1752 = vunpack.c.0.s8 %v1751
        %v1753 = vlaneseq
        %v1754 = vshrl.u32 %v1753, 7
        %v1755 = vsub.s32 %v1752, %v1754
        %v1756 = vrot.slane %v1746, %v1755
        %v1758 = vunpack.c.l.s4 1966171168
        %v1759 = vunpack.c.0.s8 %v1758
        %v1760 = vlaneseq
        %v1761 = vshrl.u32 %v1760, 7
        %v1762 = vsub.s32 %v1759, %v1761
        %v1763 = vrot.slane %v1747, %v1762
        %v1765 = vunpack.c.l.s4 1966171168
        %v1766 = vunpack.c.0.s8 %v1765
        %v1767 = vlaneseq
        %v1768 = vshrl.u32 %v1767, 7
        %v1769 = vsub.s32 %v1766, %v1768
        %v1770 = vrot.slane %v1748, %v1769
        %v1772 = vunpack.c.l.s4 1966171168
        %v1773 = vunpack.c.0.s8 %v1772
        %v1774 = vlaneseq
        %v1775 = vshrl.u32 %v1774, 7
        %v1776 = vsub.s32 %v1773, %v1775
        %v1777 = vrot.slane %v1749, %v1776
        %v1778 = vcombine.low %v1756, %v1763
        %v1779 = vcombine.low %v1770, %v1777
        %v1781 = vunpack.c.l.s4 1966171168
        %v1782 = vunpack.c.0.s8 %v1781
        %v1783 = vlaneseq
        %v1784 = vshrl.u32 %v1783, 7
        %v1785 = vsub.s32 %v1782, %v1784
        %v1786 = vrot.slane %v1778, %v1785
        %v1788 = vunpack.c.l.s4 1966171168
        %v1789 = vunpack.c.0.s8 %v1788
        %v1790 = vlaneseq
        %v1791 = vshrl.u32 %v1790, 7
        %v1792 = vsub.s32 %v1789, %v1791
        %v1793 = vrot.slane %v1779, %v1792
        %v1794 = vcombine.low %v1786, %v1793
        %v1795 = vcombine.low %v1722, %v1723
        %v1796 = vcombine.low %v1724, %v1725
        %v1797 = vcombine.low %v1726, %v1727
        %v1798 = vcombine.low %v1728, %v1729
        %v1800 = vunpack.c.l.s4 1966171168
        %v1801 = vunpack.c.0.s8 %v1800
        %v1802 = vlaneseq
        %v1803 = vshrl.u32 %v1802, 7
        %v1804 = vsub.s32 %v1801, %v1803
        %v1805 = vrot.slane %v1795, %v1804
        %v1807 = vunpack.c.l.s4 1966171168
        %v1808 = vunpack.c.0.s8 %v1807
        %v1809 = vlaneseq
        %v1810 = vshrl.u32 %v1809, 7
        %v1811 = vsub.s32 %v1808, %v1810
        %v1812 = vrot.slane %v1796, %v1811
        %v1814 = vunpack.c.l.s4 1966171168
        %v1815 = vunpack.c.0.s8 %v1814
        %v1816 = vlaneseq
        %v1817 = vshrl.u32 %v1816, 7
        %v1818 = vsub.s32 %v1815, %v1817
        %v1819 = vrot.slane %v1797, %v1818
        %v1821 = vunpack.c.l.s4 1966171168
        %v1822 = vunpack.c.0.s8 %v1821
        %v1823 = vlaneseq
        %v1824 = vshrl.u32 %v1823, 7
        %v1825 = vsub.s32 %v1822, %v1824
        %v1826 = vrot.slane %v1798, %v1825
        %v1827 = vcombine.low %v1805, %v1812
        %v1828 = vcombine.low %v1819, %v1826
        %v1830 = vunpack.c.l.s4 1966171168
        %v1831 = vunpack.c.0.s8 %v1830
        %v1832 = vlaneseq
        %v1833 = vshrl.u32 %v1832, 7
        %v1834 = vsub.s32 %v1831, %v1833
        %v1835 = vrot.slane %v1827, %v1834
        %v1837 = vunpack.c.l.s4 1966171168
        %v1838 = vunpack.c.0.s8 %v1837
        %v1839 = vlaneseq
        %v1840 = vshrl.u32 %v1839, 7
        %v1841 = vsub.s32 %v1838, %v1840
        %v1842 = vrot.slane %v1828, %v1841
        %v1843 = vcombine.low %v1835, %v1842
        %1846 = vst [vmem:[%s187] sm:$0xff] %v1794
        %1847 = vst [vmem:[%s187 + $0x8] sm:$0xff] %v1843
        %s1848 = sand.u32 %s97, 1
        %s1849 = scalar_lea.sflag [#allocation5], %s1848
        %s1850 = sand.u32 %s97, 1
        %s1851 = smul.addr %s1850, 16
        %s1852 = scalar_lea.vmem [#allocation6], %s1851
        // Predicated region
        $region37: #{critic_forward_feature_major.1} parent=31 // pred_check
          %p1853 = pneg %p107
        $region38: #{critic_forward_feature_major.1} parent=31 // pred_check_branch
          %1855 = sbr.rel (%p1853) target = $region40
        $region39: #{critic_forward_feature_major.1} parent=31 // pred_region
          %s1856 = smul.u32 16, %s21
          %s1858 = ssub.s32 256, 256
          %1859 = vsyncadd %s1849, %s1858
          %s1860 = smul.addr %s1856, 16
          %s1861 = scalar_lea.hbm %s3, %s1860
          %s1863 = sshll.u32 %s1852, 4
          %s1864 = int_to_ptr.vmem [resolvable:$true] %s1863
          %1866 = dma.vmem_to_hbm [thread:$0]  %s1864, 256, %s1861, %s1849
        $region40: #{critic_forward_feature_major.1} parent=31 // pred_fallthru
          _
      $region32: #{critic_forward_feature_major.1} parent=5 // pred_fallthru
        _
      %p1867 = scmp.le.s32.totalorder 2, %s16
      // Predicated region
      $region41: #{critic_forward_feature_major.1} parent=5 // pred_check
        %p1868 = pneg %p1867
      $region42: #{critic_forward_feature_major.1} parent=5 // pred_check_branch
        %1870 = sbr.rel (%p1868) target = $region44
      $region43: #{critic_forward_feature_major.1} parent=5 // pred_region
        %s1871 = ssub.s32 %s16, 2
        // Predicated region
        $region45: #{critic_forward_feature_major.1} parent=43 // pred_check
          %p1872 = pneg %p113
        $region46: #{critic_forward_feature_major.1} parent=43 // pred_check_branch
          %1874 = sbr.rel (%p1872) target = $region48
        $region47: #{critic_forward_feature_major.1} parent=43 // pred_region
          %s1875 = sand.u32 %s98, 1
          %s1876 = scalar_lea.sflag [#allocation5], %s1875
          %s1877 = sand.u32 %s98, 1
          %s1878 = smul.addr %s1877, 16
          %s1879 = scalar_lea.vmem [#allocation6], %s1878
          %1880 = dma.done %s1876, 256
        $region48: #{critic_forward_feature_major.1} parent=43 // pred_fallthru
          _
      $region44: #{critic_forward_feature_major.1} parent=5 // pred_fallthru
        _
    $region6: #{critic_forward_feature_major.1} parent=1 // loop_footer
      %s20 = sadd.s32 1, %s16
    $region7: #{critic_forward_feature_major.1} parent=1 // loop_footer_branch
      %15 = sbr.rel target = $region3
    $region8: #{critic_forward_feature_major.1} parent=1 // loop_exit
      _
    %1881 = vsyncpa [#allocation4], 1
    %s1882 = scalar_lea.sflag [#allocation4], 1
    %1883 = vsyncpa %s1882, 1
    %1884 = vsyncpa [#allocation5], 1
    %s1885 = scalar_lea.sflag [#allocation5], 1
    %1886 = vsyncpa %s1885, 1

</llo_original>
